<compile_context>
chip_gen: v7x
topology: tpu7x:2x2x1
jax: 0.10.0
libtpu: 0.0.40
codegen_flags: <defaults>
</compile_context>

<pallas_src>
import functools
import math

import jax
import jax.numpy as jnp
from jax.experimental import pallas as pl
from jax.experimental.pallas import tpu as pltpu


# ----------------------------- helpers -----------------------------

def _row_tile(m, target=512):
    """Largest row tile <= target that divides M (multiple of 8 when tiled)."""
    if m <= target:
        return m
    tm = (target // 8) * 8
    while tm >= 8:
        if m % tm == 0:
            return tm
        tm -= 8
    return m


def _q_tile(s, b):
    """Query tile for the attention grid's second ('parallel') axis.

    Gives >=2-way megacore work when B == 1 without duplicating the K/V
    projection when the batch already provides parallel grid steps."""
    if b == 1:
        half = s // 2
        if half >= 8 and half % 8 == 0 and s == 2 * half:
            return half
    return s


def _vmem_limit(working_set_bytes):
    # per-kernel scoped-VMEM budget: working set + Mosaic scratch headroom,
    # clamped so it is safe on v7x's 64 MiB physical VMEM.
    # TODO(synk): raise the cap toward ~100 MiB on v5e/v6e (128 MiB physical)
    # to enable 1024-row FFN tiles.
    want = int(working_set_bytes) + (8 << 20)
    return max(16 << 20, min(48 << 20, want))


def _mosaic(dim_sem, working_set_bytes):
    return pltpu.CompilerParams(dimension_semantics=dim_sem,
                                vmem_limit_bytes=_vmem_limit(working_set_bytes))


def _resident(block_shape, index_map):
    """BlockSpec for a constant-index (resident) operand.

    The block index never changes across the grid, so a single pipeline
    buffer is enough — double-buffering it only wastes VMEM (critical on
    v7x's 64 MiB budget)."""
    try:
        return pl.BlockSpec(block_shape, index_map, pipeline_mode=pl.Buffered(1))
    except (AttributeError, TypeError):
        # older jax without pipeline_mode: fall back to default buffering
        return pl.BlockSpec(block_shape, index_map)


# ----------------------------- Pallas kernels -----------------------------

def _layernorm_kernel(x_ref, g_ref, b_ref, o_ref):
    x = x_ref[...].astype(jnp.float32)          # bf16 in (halves HBM read), f32 math
    mu = jnp.mean(x, axis=-1, keepdims=True)
    var = jnp.mean((x - mu) ** 2, axis=-1, keepdims=True)
    y = (x - mu) * jax.lax.rsqrt(var + 1e-12)
    o_ref[...] = (y * g_ref[...] + b_ref[...]).astype(o_ref.dtype)


def layernorm(x2d_bf16, gamma, beta):
    """Row-tiled LayerNorm on the embeddings: bf16 in -> bf16 out."""
    M, D = x2d_bf16.shape
    tm = _row_tile(M)
    est = 4 * tm * D * 2 + 2 * D * 4
    return pl.pallas_call(
        _layernorm_kernel,
        out_shape=jax.ShapeDtypeStruct((M, D), jnp.bfloat16),
        grid=(M // tm,),
        in_specs=[pl.BlockSpec((tm, D), lambda i: (i, 0)),
                  _resident((1, D), lambda i: (0, 0)),
                  _resident((1, D), lambda i: (0, 0))],
        out_specs=pl.BlockSpec((tm, D), lambda i: (i, 0)),
        compiler_params=_mosaic(("parallel",), est),
    )(x2d_bf16, gamma.reshape(1, D).astype(jnp.float32),
      beta.reshape(1, D).astype(jnp.float32))


def _attn_layer_kernel(xq_ref, xkv_ref, bias_ref,
                       wq_ref, wk_ref, wv_ref, bq_ref, bk_ref, bv_ref,
                       wo_ref, bo_ref, g_ref, b_ref,
                       o_ref, ctx_ref,
                       *, n_heads, d_head, scale):
    # Fused: Q/K/V projection + per-head attention + output projection +
    # residual + LayerNorm1.  One (batch, query-tile) grid step; heads are
    # static lane slices; the HBM store is a lane-dense (tq, D) tile.
    xq = xq_ref[0]                                            # (tq, D) bf16
    xkv = xkv_ref[0]                                          # (S,  D) bf16
    bias = bias_ref[0]                                        # (1,  S) f32 additive

    q = jnp.dot(xq, wq_ref[...], preferred_element_type=jnp.float32) + bq_ref[...]
    k = jnp.dot(xkv, wk_ref[...], preferred_element_type=jnp.float32) + bk_ref[...]
    v = jnp.dot(xkv, wv_ref[...], preferred_element_type=jnp.float32) + bv_ref[...]
    q = q.astype(jnp.bfloat16)
    k = k.astype(jnp.bfloat16)
    v = v.astype(jnp.bfloat16)

    # TODO(synk): at BERT-base (d_head=64) heads could be processed in
    # 128-lane-aligned pairs if the bundle dump shows lane-shuffle cost here.
    for h in range(n_heads):
        lo, hi = h * d_head, (h + 1) * d_head
        s = jax.lax.dot_general(q[:, lo:hi], k[:, lo:hi], (((1,), (1,)), ((), ())),
                                preferred_element_type=jnp.float32)
        s = s * scale + bias                                  # mask padded keys
        s = s - jnp.max(s, axis=-1, keepdims=True)
        p = jnp.exp(s.astype(jnp.bfloat16))                   # bf16 EUP exp
        denom = jnp.sum(p.astype(jnp.float32), axis=-1, keepdims=True)  # f32 reduce
        ctx_h = jnp.dot(p, v[:, lo:hi], preferred_element_type=jnp.float32)
        ctx_ref[:, lo:hi] = ctx_h * pl.reciprocal(denom, approx=True)

    # fused output projection + residual + LayerNorm1 epilogue
    out = jnp.dot(ctx_ref[...].astype(jnp.bfloat16), wo_ref[...],
                  preferred_element_type=jnp.float32) + bo_ref[...]
    y = out + xq.astype(jnp.float32)
    mu = jnp.mean(y, axis=-1, keepdims=True)
    var = jnp.mean((y - mu) ** 2, axis=-1, keepdims=True)
    yn = (y - mu) * jax.lax.rsqrt(var + 1e-12)
    o_ref[0] = (yn * g_ref[...] + b_ref[...]).astype(o_ref.dtype)


def attn_layer(x3, key_bias, wq, wk, wv, bq, bk, bv, wo, bo, ln_g, ln_b, *, n_heads):
    B, S, D = x3.shape
    d_head = D // n_heads
    tq = _q_tile(S, B)
    f32 = jnp.float32
    kern = functools.partial(_attn_layer_kernel, n_heads=n_heads, d_head=d_head,
                             scale=1.0 / math.sqrt(d_head))

    xq_spec = pl.BlockSpec((1, tq, D), lambda b, qi: (b, qi, 0))
    xkv_spec = pl.BlockSpec((1, S, D), lambda b, qi: (b, 0, 0))
    bias_spec = pl.BlockSpec((1, 1, S), lambda b, qi: (b, 0, 0))
    w_spec = _resident((D, D), lambda b, qi: (0, 0))
    vec_spec = _resident((1, D), lambda b, qi: (0, 0))

    est = (2 * tq * D * 2          # x query tile (double-buffered, bf16)
           + 2 * S * D * 2         # x full-seq tile for K/V (double-buffered)
           + 2 * tq * D * 2        # output tile (double-buffered)
           + 4 * D * D * 2         # wq/wk/wv/wo resident, single-buffered
           + tq * D * 4            # ctx scratch (f32)
           + 3 * S * D * 4         # q/k/v f32 intermediates
           + 2 * tq * S * 4)       # score / prob temporaries

    return pl.pallas_call(
        kern,
        out_shape=jax.ShapeDtypeStruct((B, S, D), jnp.bfloat16),
        grid=(B, S // tq),
        in_specs=[xq_spec, xkv_spec, bias_spec,
                  w_spec, w_spec, w_spec, vec_spec, vec_spec, vec_spec,
                  w_spec, vec_spec, vec_spec, vec_spec],
        out_specs=pl.BlockSpec((1, tq, D), lambda b, qi: (b, qi, 0)),
        scratch_shapes=[pltpu.VMEM((tq, D), jnp.float32)],
        compiler_params=_mosaic(("parallel", "parallel"), est),
    )(x3, x3, key_bias,
      wq, wk, wv,
      bq.reshape(1, D).astype(f32), bk.reshape(1, D).astype(f32),
      bv.reshape(1, D).astype(f32),
      wo, bo.reshape(1, D).astype(f32),
      ln_g.reshape(1, D).astype(f32), ln_b.reshape(1, D).astype(f32))


def _ffn_ln_kernel(x_ref, w1_ref, b1_ref, w2_ref, b2_ref, g_ref, b_ref, o_ref):
    # fused FFN + residual + LayerNorm2
    x = x_ref[...]                                            # (tm, D) bf16
    h = jnp.dot(x, w1_ref[...], preferred_element_type=jnp.float32) + b1_ref[...]
    h = jax.nn.gelu(h.astype(jnp.bfloat16))                   # bf16 EUP gelu
    y = jnp.dot(h, w2_ref[...], preferred_element_type=jnp.float32) + b2_ref[...]
    y = y + x.astype(jnp.float32)                             # residual in f32
    mu = jnp.mean(y, axis=-1, keepdims=True)
    var = jnp.mean((y - mu) ** 2, axis=-1, keepdims=True)
    yn = (y - mu) * jax.lax.rsqrt(var + 1e-12)
    o_ref[...] = (yn * g_ref[...] + b_ref[...]).astype(o_ref.dtype)


def ffn_ln(x2d, w1, b1, w2, b2, ln_g, ln_b):
    M, D = x2d.shape
    F = w1.shape[1]
    tm = _row_tile(M)
    row = pl.BlockSpec((tm, D), lambda i: (i, 0))
    est = (4 * tm * D * 2          # in + out tiles, double-buffered bf16
           + 2 * D * F * 2         # w1 + w2 resident, single-buffered bf16
           + tm * F * 4            # (tm, F) intermediate (f32 before gelu cast)
           + tm * D * 4)           # f32 epilogue temporaries
    return pl.pallas_call(
        _ffn_ln_kernel,
        out_shape=jax.ShapeDtypeStruct((M, D), jnp.bfloat16),
        grid=(M // tm,),
        in_specs=[row,
                  _resident((D, F), lambda i: (0, 0)),
                  _resident((1, F), lambda i: (0, 0)),
                  _resident((F, D), lambda i: (0, 0)),
                  _resident((1, D), lambda i: (0, 0)),
                  _resident((1, D), lambda i: (0, 0)),
                  _resident((1, D), lambda i: (0, 0))],
        out_specs=row,
        compiler_params=_mosaic(("parallel",), est),
    )(x2d, w1, b1.reshape(1, F).astype(jnp.float32),
      w2, b2.reshape(1, D).astype(jnp.float32),
      ln_g.reshape(1, D).astype(jnp.float32),
      ln_b.reshape(1, D).astype(jnp.float32))


def _cls_ce_kernel(x_ref, w_ref, b_ref, lab_ref, logits_ref, loss_ref, acc_ref,
                   *, ignore_index):
    # fused classifier matmul + CrossEntropyLoss(ignore_index), mean reduction.
    # Padded label columns carry a -1e9 bias so they never affect max / LSE.
    i = pl.program_id(0)

    @pl.when(i == 0)
    def _():
        acc_ref[0] = 0.0
        acc_ref[1] = 0.0

    x = x_ref[...]                                            # (tm, D) bf16
    logits = jnp.dot(x, w_ref[...], preferred_element_type=jnp.float32) + b_ref[...]
    logits_ref[...] = logits.astype(logits_ref.dtype)         # lane-dense (tm, 128k)

    labels = lab_ref[...]                                     # (tm, 1) int32
    m = jnp.max(logits, axis=-1, keepdims=True)
    lse = jnp.log(jnp.sum(jnp.exp(logits - m), axis=-1, keepdims=True)) + m
    logp = logits - lse
    col = jax.lax.broadcasted_iota(jnp.int32, logits.shape, 1)
    onehot = (col == labels).astype(jnp.float32)
    nll = -jnp.sum(onehot * logp, axis=-1, keepdims=True)     # (tm, 1)
    valid = (labels != ignore_index).astype(jnp.float32)
    acc_ref[0] += jnp.sum(nll * valid)
    acc_ref[1] += jnp.sum(valid)

    @pl.when(i == pl.num_programs(0) - 1)
    def _():
        loss_ref[0, 0] = acc_ref[0] / jnp.maximum(acc_ref[1], 1.0)


def classifier_ce(x2d, w, b, labels, *, ignore_index):
    M, D = x2d.shape
    C = w.shape[1]
    Cp = ((C + 127) // 128) * 128                             # lane-dense logits
    w_p = jnp.zeros((D, Cp), w.dtype).at[:, :C].set(w)
    b_p = jnp.full((1, Cp), -1e9, jnp.float32).at[0, :C].set(b.astype(jnp.float32))
    tm = _row_tile(M)
    kern = functools.partial(_cls_ce_kernel, ignore_index=ignore_index)
    est = (2 * tm * D * 2 + D * Cp * 2 + Cp * 4
           + 2 * tm * Cp * 4 + tm * Cp * 4 + tm * 4)
    logits_p, loss = pl.pallas_call(
        kern,
        out_shape=(jax.ShapeDtypeStruct((M, Cp), jnp.float32),
                   jax.ShapeDtypeStruct((1, 1), jnp.float32)),
        grid=(M // tm,),
        in_specs=[pl.BlockSpec((tm, D), lambda i: (i, 0)),
                  _resident((D, Cp), lambda i: (0, 0)),
                  _resident((1, Cp), lambda i: (0, 0)),
                  pl.BlockSpec((tm, 1), lambda i: (i, 0))],
        out_specs=(pl.BlockSpec((tm, Cp), lambda i: (i, 0)),
                   pl.BlockSpec(memory_space=pltpu.MemorySpace.SMEM)),
        scratch_shapes=[pltpu.SMEM((2,), jnp.float32)],
        compiler_params=_mosaic(("arbitrary",), est),   # accumulating grid
    )(x2d, w_p, b_p, labels.reshape(M, 1).astype(jnp.int32))
    return loss[0, 0], logits_p[:, :C]


# ----------------------------- model (glue) -----------------------------

def init_params(key, *, n_layers, d_model, d_ff, n_heads, max_seq_len,
                vocab_size, num_labels):
    def nrm(k, shape):
        return (0.02 * jax.random.normal(k, shape)).astype(jnp.float32)

    keys = jax.random.split(key, 8 + n_layers)
    params = {
        "tok_emb": nrm(keys[0], (vocab_size, d_model)),
        "pos_emb": nrm(keys[1], (max_seq_len, d_model)),
        "seg_emb": nrm(keys[2], (2, d_model)),
        "emb_ln_g": jnp.ones((d_model,), jnp.float32),
        "emb_ln_b": jnp.zeros((d_model,), jnp.float32),
        "cls_w": nrm(keys[3], (d_model, num_labels)),
        "cls_b": jnp.zeros((num_labels,), jnp.float32),
        "layers": [],
    }
    for li in range(n_layers):
        lk = jax.random.split(keys[8 + li], 6)
        params["layers"].append({
            "wq": nrm(lk[0], (d_model, d_model)), "bq": jnp.zeros((d_model,)),
            "wk": nrm(lk[1], (d_model, d_model)), "bk": jnp.zeros((d_model,)),
            "wv": nrm(lk[2], (d_model, d_model)), "bv": jnp.zeros((d_model,)),
            "wo": nrm(lk[3], (d_model, d_model)), "bo": jnp.zeros((d_model,)),
            "ln1_g": jnp.ones((d_model,)), "ln1_b": jnp.zeros((d_model,)),
            "w1": nrm(lk[4], (d_model, d_ff)), "b1": jnp.zeros((d_ff,)),
            "w2": nrm(lk[5], (d_ff, d_model)), "b2": jnp.zeros((d_model,)),
            "ln2_g": jnp.ones((d_model,)), "ln2_b": jnp.zeros((d_model,)),
        })
    return params


def bert_softmax_for_ner_forward(params, input_ids, token_type_ids, labels,
                                 *, pad_id, n_heads):
    B, S = input_ids.shape
    D = params["tok_emb"].shape[1]
    M = B * S
    bf16 = jnp.bfloat16

    # additive key-padding bias [B, 1, S] (equivalent to get_attn_pad_mask,
    # without materializing the redundant [B, S, S] mask)
    key_bias = jnp.where(input_ids == pad_id, -1e9, 0.0).astype(jnp.float32)
    key_bias = key_bias[:, None, :]

    # embeddings (gather is XLA glue; LN is a Pallas kernel, bf16 in/out)
    pos = jnp.arange(S, dtype=jnp.int32)
    emb = (jnp.take(params["tok_emb"], input_ids, axis=0)
           + jnp.take(params["pos_emb"], pos, axis=0)[None, :, :]
           + jnp.take(params["seg_emb"], token_type_ids, axis=0))
    x2d = layernorm(emb.reshape(M, D).astype(bf16),
                    params["emb_ln_g"], params["emb_ln_b"])
    x3 = x2d.reshape(B, S, D)

    for lp in params["layers"]:
        # fused QKV-proj + attention + out-proj + residual + LN1
        # (q/k/v never leave VMEM; reshapes here are free, no transposes)
        x3 = attn_layer(x3, key_bias,
                        lp["wq"].astype(bf16), lp["wk"].astype(bf16),
                        lp["wv"].astype(bf16),
                        lp["bq"], lp["bk"], lp["bv"],
                        lp["wo"].astype(bf16), lp["bo"],
                        lp["ln1_g"], lp["ln1_b"], n_heads=n_heads)

        # FFN + residual + LN2
        x2d = ffn_ln(x3.reshape(M, D), lp["w1"].astype(bf16), lp["b1"],
                     lp["w2"].astype(bf16), lp["b2"],
                     lp["ln2_g"], lp["ln2_b"])
        x3 = x2d.reshape(B, S, D)

    # dropout is identity in eval mode; fused classifier + CE loss
    # TODO(synk): reference uses ignore_index=pad_id (label id == pad_id is
    # dropped from the loss even for real tokens) — kept to match the module.
    loss, logits2d = classifier_ce(x2d, params["cls_w"].astype(bf16),
                                   params["cls_b"], labels.reshape(-1),
                                   ignore_index=pad_id)
    logits = logits2d.reshape(B, S, -1)
    return loss, logits


# ----------------------------- main -----------------------------

if __name__ == "__main__":
    n_layers = 2
    d_model = 32
    d_ff = 64
    n_heads = 4
    max_seq_len = 8
    vocab_size = 50
    pad_id = 0
    num_labels = 7

    B, S = 2, 8

    key = jax.random.PRNGKey(0)
    kp, ki, kl = jax.random.split(key, 3)

    params = init_params(kp, n_layers=n_layers, d_model=d_model, d_ff=d_ff,
                         n_heads=n_heads, max_seq_len=max_seq_len,
                         vocab_size=vocab_size, num_labels=num_labels)

    input_ids = jax.random.randint(ki, (B, S), 1, vocab_size, dtype=jnp.int32)
    # make trailing tokens padding to exercise the attention pad mask
    input_ids = input_ids.at[:, -2:].set(pad_id)
    token_type_ids = jnp.zeros((B, S), dtype=jnp.int32)
    labels = jax.random.randint(kl, (B, S), 0, num_labels, dtype=jnp.int32)
    labels = labels.at[:, -2:].set(pad_id)   # ignored by CE (ignore_index=pad_id)

    fwd = jax.jit(functools.partial(bert_softmax_for_ner_forward,
                                    pad_id=pad_id, n_heads=n_heads))
    loss, logits = fwd(params, input_ids, token_type_ids, labels)
    jax.block_until_ready((loss, logits))

    assert logits.shape == (B, S, num_labels)
    assert loss.shape == ()
    assert bool(jnp.isfinite(loss))
    print("KERNEL_OK")
</pallas_src>

<mosaic_0001>
module attributes {stable_mosaic.version = 11 : i64} {
  func.func @_layernorm_kernel(%arg0: i32, %arg1: memref<16x32xbf16, #tpu.memory_space<vmem>>, %arg2: memref<1x32xf32, #tpu.memory_space<vmem>>, %arg3: memref<1x32xf32, #tpu.memory_space<vmem>>, %arg4: memref<16x32xbf16, #tpu.memory_space<vmem>>) attributes {dimension_semantics = [#tpu.dimension_semantics<parallel>], iteration_bounds = array<i64: 1>, scalar_prefetch = 0 : i64, scratch_operands = 0 : i64, tpu.core_type = #tpu.core_type<tc>, window_params = [{transform_indices = @transform_0, window_bounds = array<i64: 16, 32>}, {pipeline_mode = #tpu.pipeline_mode<synchronous>, transform_indices = @transform_1, window_bounds = array<i64: 1, 32>}, {pipeline_mode = #tpu.pipeline_mode<synchronous>, transform_indices = @transform_2, window_bounds = array<i64: 1, 32>}, {transform_indices = @transform_3, window_bounds = array<i64: 16, 32>}]} {
    %c0 = arith.constant 0 : index
    %c0_0 = arith.constant 0 : index
    %0 = vector.load %arg1[%c0, %c0_0] : memref<16x32xbf16, #tpu.memory_space<vmem>>, vector<16x32xbf16>
    %1 = arith.extf %0 : vector<16x32xbf16> to vector<16x32xf32>
    %cst = arith.constant dense<0.000000e+00> : vector<16xf32>
    %2 = vector.multi_reduction <add>, %1, %cst [1] : vector<16x32xf32> to vector<16xf32>
    %3 = vector.shape_cast %2 : vector<16xf32> to vector<16x1xf32>
    %cst_1 = arith.constant 3.200000e+01 : f32
    %4 = vector.broadcast %cst_1 : f32 to vector<16x1xf32>
    %5 = arith.divf %3, %4 : vector<16x1xf32>
    %6 = vector.broadcast %5 : vector<16x1xf32> to vector<16x32xf32>
    %7 = arith.subf %1, %6 : vector<16x32xf32>
    %8 = arith.mulf %7, %7 : vector<16x32xf32>
    %cst_2 = arith.constant dense<0.000000e+00> : vector<16xf32>
    %9 = vector.multi_reduction <add>, %8, %cst_2 [1] : vector<16x32xf32> to vector<16xf32>
    %10 = vector.shape_cast %9 : vector<16xf32> to vector<16x1xf32>
    %cst_3 = arith.constant 3.200000e+01 : f32
    %11 = vector.broadcast %cst_3 : f32 to vector<16x1xf32>
    %12 = arith.divf %10, %11 : vector<16x1xf32>
    %13 = vector.broadcast %5 : vector<16x1xf32> to vector<16x32xf32>
    %14 = arith.subf %1, %13 : vector<16x32xf32>
    %cst_4 = arith.constant 9.99999996E-13 : f32
    %15 = vector.broadcast %cst_4 : f32 to vector<16x1xf32>
    %16 = arith.addf %12, %15 : vector<16x1xf32>
    %17 = math.rsqrt %16 : vector<16x1xf32>
    %18 = vector.broadcast %17 : vector<16x1xf32> to vector<16x32xf32>
    %19 = arith.mulf %14, %18 : vector<16x32xf32>
    %c0_5 = arith.constant 0 : index
    %c0_6 = arith.constant 0 : index
    %20 = vector.load %arg2[%c0_5, %c0_6] : memref<1x32xf32, #tpu.memory_space<vmem>>, vector<1x32xf32>
    %21 = vector.broadcast %20 : vector<1x32xf32> to vector<16x32xf32>
    %22 = arith.mulf %19, %21 : vector<16x32xf32>
    %c0_7 = arith.constant 0 : index
    %c0_8 = arith.constant 0 : index
    %23 = vector.load %arg3[%c0_7, %c0_8] : memref<1x32xf32, #tpu.memory_space<vmem>>, vector<1x32xf32>
    %24 = vector.broadcast %23 : vector<1x32xf32> to vector<16x32xf32>
    %25 = arith.addf %22, %24 : vector<16x32xf32>
    %26 = arith.truncf %25 : vector<16x32xf32> to vector<16x32xbf16>
    %c0_9 = arith.constant 0 : index
    %c0_10 = arith.constant 0 : index
    %27 = vector.load %arg4[%c0_9, %c0_10] : memref<16x32xbf16, #tpu.memory_space<vmem>>, vector<16x32xbf16>
    tpu.vector_store %arg4[%c0_9, %c0_10], %26 {strides = array<i32>} : memref<16x32xbf16, #tpu.memory_space<vmem>>, vector<16x32xbf16>,
    return
  }
  func.func @transform_0(%arg0: i32) -> (i32, i32) {
    %c0_i32 = arith.constant 0 : i32
    %c0_i32_0 = arith.constant 0 : i32
    return %arg0, %c0_i32 : i32, i32
  }
  func.func @transform_1(%arg0: i32) -> (i32, i32) {
    %c0_i32 = arith.constant 0 : i32
    %c0_i32_0 = arith.constant 0 : i32
    %c0_i32_1 = arith.constant 0 : i32
    return %c0_i32, %c0_i32_0 : i32, i32
  }
  func.func @transform_2(%arg0: i32) -> (i32, i32) {
    %c0_i32 = arith.constant 0 : i32
    %c0_i32_0 = arith.constant 0 : i32
    %c0_i32_1 = arith.constant 0 : i32
    return %c0_i32, %c0_i32_0 : i32, i32
  }
  func.func @transform_3(%arg0: i32) -> (i32, i32) {
    %c0_i32 = arith.constant 0 : i32
    %c0_i32_0 = arith.constant 0 : i32
    return %arg0, %c0_i32 : i32, i32
  }
}

module attributes {stable_mosaic.version = 11 : i64} {
  func.func @_attn_layer_kernel(%arg0: i32, %arg1: i32, %arg2: memref<1x8x32xbf16, #tpu.memory_space<vmem>>, %arg3: memref<1x8x32xbf16, #tpu.memory_space<vmem>>, %arg4: memref<1x1x8xf32, #tpu.memory_space<vmem>>, %arg5: memref<32x32xbf16, #tpu.memory_space<vmem>>, %arg6: memref<32x32xbf16, #tpu.memory_space<vmem>>, %arg7: memref<32x32xbf16, #tpu.memory_space<vmem>>, %arg8: memref<1x32xf32, #tpu.memory_space<vmem>>, %arg9: memref<1x32xf32, #tpu.memory_space<vmem>>, %arg10: memref<1x32xf32, #tpu.memory_space<vmem>>, %arg11: memref<32x32xbf16, #tpu.memory_space<vmem>>, %arg12: memref<1x32xf32, #tpu.memory_space<vmem>>, %arg13: memref<1x32xf32, #tpu.memory_space<vmem>>, %arg14: memref<1x32xf32, #tpu.memory_space<vmem>>, %arg15: memref<1x8x32xbf16, #tpu.memory_space<vmem>>, %arg16: memref<8x32xf32, #tpu.memory_space<vmem>>) attributes {dimension_semantics = [#tpu.dimension_semantics<parallel>, #tpu.dimension_semantics<parallel>], iteration_bounds = array<i64: 2, 1>, scalar_prefetch = 0 : i64, scratch_operands = 1 : i64, tpu.core_type = #tpu.core_type<tc>, window_params = [{transform_indices = @transform_0, window_bounds = array<i64: 1, 8, 32>}, {transform_indices = @transform_1, window_bounds = array<i64: 1, 8, 32>}, {transform_indices = @transform_2, window_bounds = array<i64: 1, 1, 8>}, {pipeline_mode = #tpu.pipeline_mode<synchronous>, transform_indices = @transform_3, window_bounds = array<i64: 32, 32>}, {pipeline_mode = #tpu.pipeline_mode<synchronous>, transform_indices = @transform_4, window_bounds = array<i64: 32, 32>}, {pipeline_mode = #tpu.pipeline_mode<synchronous>, transform_indices = @transform_5, window_bounds = array<i64: 32, 32>}, {pipeline_mode = #tpu.pipeline_mode<synchronous>, transform_indices = @transform_6, window_bounds = array<i64: 1, 32>}, {pipeline_mode = #tpu.pipeline_mode<synchronous>, transform_indices = @transform_7, window_bounds = array<i64: 1, 32>}, {pipeline_mode = #tpu.pipeline_mode<synchronous>, transform_indices = @transform_8, window_bounds = array<i64: 1, 32>}, {pipeline_mode = #tpu.pipeline_mode<synchronous>, transform_indices = @transform_9, window_bounds = array<i64: 32, 32>}, {pipeline_mode = #tpu.pipeline_mode<synchronous>, transform_indices = @transform_10, window_bounds = array<i64: 1, 32>}, {pipeline_mode = #tpu.pipeline_mode<synchronous>, transform_indices = @transform_11, window_bounds = array<i64: 1, 32>}, {pipeline_mode = #tpu.pipeline_mode<synchronous>, transform_indices = @transform_12, window_bounds = array<i64: 1, 32>}, {transform_indices = @transform_13, window_bounds = array<i64: 1, 8, 32>}]} {
    %c0 = arith.constant 0 : index
    %c0_0 = arith.constant 0 : index
    %c0_1 = arith.constant 0 : index
    %0 = vector.load %arg2[%c0, %c0_0, %c0_1] : memref<1x8x32xbf16, #tpu.memory_space<vmem>>, vector<1x8x32xbf16>
    %1 = vector.shape_cast %0 : vector<1x8x32xbf16> to vector<8x32xbf16>
    %c0_2 = arith.constant 0 : index
    %c0_3 = arith.constant 0 : index
    %c0_4 = arith.constant 0 : index
    %2 = vector.load %arg3[%c0_2, %c0_3, %c0_4] : memref<1x8x32xbf16, #tpu.memory_space<vmem>>, vector<1x8x32xbf16>
    %3 = vector.shape_cast %2 : vector<1x8x32xbf16> to vector<8x32xbf16>
    %c0_5 = arith.constant 0 : index
    %c0_6 = arith.constant 0 : index
    %c0_7 = arith.constant 0 : index
    %4 = vector.load %arg4[%c0_5, %c0_6, %c0_7] : memref<1x1x8xf32, #tpu.memory_space<vmem>>, vector<1x1x8xf32>
    %5 = vector.shape_cast %4 : vector<1x1x8xf32> to vector<1x8xf32>
    %c0_8 = arith.constant 0 : index
    %c0_9 = arith.constant 0 : index
    %6 = vector.load %arg5[%c0_8, %c0_9] : memref<32x32xbf16, #tpu.memory_space<vmem>>, vector<32x32xbf16>
    %cst = arith.constant dense<0.000000e+00> : vector<8x32xf32>
    %7 = tpu.matmul %1, %6, %cst {dimension_numbers = #tpu.dot_dimension_numbers<[1], [0], [0], [1], [0, 0, 1, 1], [], []>} : vector<8x32xbf16>, vector<32x32xbf16>, vector<8x32xf32> -> vector<8x32xf32>
    %c0_10 = arith.constant 0 : index
    %c0_11 = arith.constant 0 : index
    %8 = vector.load %arg8[%c0_10, %c0_11] : memref<1x32xf32, #tpu.memory_space<vmem>>, vector<1x32xf32>
    %9 = vector.broadcast %8 : vector<1x32xf32> to vector<8x32xf32>
    %10 = arith.addf %7, %9 : vector<8x32xf32>
    %c0_12 = arith.constant 0 : index
    %c0_13 = arith.constant 0 : index
    %11 = vector.load %arg6[%c0_12, %c0_13] : memref<32x32xbf16, #tpu.memory_space<vmem>>, vector<32x32xbf16>
    %cst_14 = arith.constant dense<0.000000e+00> : vector<8x32xf32>
    %12 = tpu.matmul %3, %11, %cst_14 {dimension_numbers = #tpu.dot_dimension_numbers<[1], [0], [0], [1], [0, 0, 1, 1], [], []>} : vector<8x32xbf16>, vector<32x32xbf16>, vector<8x32xf32> -> vector<8x32xf32>
    %c0_15 = arith.constant 0 : index
    %c0_16 = arith.constant 0 : index
    %13 = vector.load %arg9[%c0_15, %c0_16] : memref<1x32xf32, #tpu.memory_space<vmem>>, vector<1x32xf32>
    %14 = vector.broadcast %13 : vector<1x32xf32> to vector<8x32xf32>
    %15 = arith.addf %12, %14 : vector<8x32xf32>
    %c0_17 = arith.constant 0 : index
    %c0_18 = arith.constant 0 : index
    %16 = vector.load %arg7[%c0_17, %c0_18] : memref<32x32xbf16, #tpu.memory_space<vmem>>, vector<32x32xbf16>
    %cst_19 = arith.constant dense<0.000000e+00> : vector<8x32xf32>
    %17 = tpu.matmul %3, %16, %cst_19 {dimension_numbers = #tpu.dot_dimension_numbers<[1], [0], [0], [1], [0, 0, 1, 1], [], []>} : vector<8x32xbf16>, vector<32x32xbf16>, vector<8x32xf32> -> vector<8x32xf32>
    %c0_20 = arith.constant 0 : index
    %c0_21 = arith.constant 0 : index
    %18 = vector.load %arg10[%c0_20, %c0_21] : memref<1x32xf32, #tpu.memory_space<vmem>>, vector<1x32xf32>
    %19 = vector.broadcast %18 : vector<1x32xf32> to vector<8x32xf32>
    %20 = arith.addf %17, %19 : vector<8x32xf32>
    %21 = arith.truncf %10 : vector<8x32xf32> to vector<8x32xbf16>
    %22 = arith.truncf %15 : vector<8x32xf32> to vector<8x32xbf16>
    %23 = arith.truncf %20 : vector<8x32xf32> to vector<8x32xbf16>
    %24 = vector.extract_strided_slice %21 {offsets = [0, 0], sizes = [8, 8], strides = [1, 1]} : vector<8x32xbf16> to vector<8x8xbf16>
    %25 = vector.extract_strided_slice %22 {offsets = [0, 0], sizes = [8, 8], strides = [1, 1]} : vector<8x32xbf16> to vector<8x8xbf16>
    %cst_22 = arith.constant dense<0.000000e+00> : vector<8x8xf32>
    %26 = tpu.matmul %24, %25, %cst_22 {dimension_numbers = #tpu.dot_dimension_numbers<[1], [1], [0], [0], [0, 0, 1, 0], [], []>} : vector<8x8xbf16>, vector<8x8xbf16>, vector<8x8xf32> -> vector<8x8xf32>
    %cst_23 = arith.constant 0.353553385 : f32
    %27 = vector.broadcast %cst_23 : f32 to vector<8x8xf32>
    %28 = arith.mulf %26, %27 : vector<8x8xf32>
    %29 = vector.broadcast %5 : vector<1x8xf32> to vector<8x8xf32>
    %30 = arith.addf %28, %29 : vector<8x8xf32>
    %cst_24 = arith.constant dense<0xFF800000> : vector<8xf32>
    %31 = vector.multi_reduction <maximumf>, %30, %cst_24 [1] : vector<8x8xf32> to vector<8xf32>
    %32 = vector.shape_cast %31 : vector<8xf32> to vector<8x1xf32>
    %33 = vector.broadcast %32 : vector<8x1xf32> to vector<8x8xf32>
    %34 = arith.subf %30, %33 : vector<8x8xf32>
    %35 = arith.truncf %34 : vector<8x8xf32> to vector<8x8xbf16>
    %36 = math.exp %35 : vector<8x8xbf16>
    %37 = arith.extf %36 : vector<8x8xbf16> to vector<8x8xf32>
    %cst_25 = arith.constant dense<0.000000e+00> : vector<8xf32>
    %38 = vector.multi_reduction <add>, %37, %cst_25 [1] : vector<8x8xf32> to vector<8xf32>
    %39 = vector.shape_cast %38 : vector<8xf32> to vector<8x1xf32>
    %40 = vector.extract_strided_slice %23 {offsets = [0, 0], sizes = [8, 8], strides = [1, 1]} : vector<8x32xbf16> to vector<8x8xbf16>
    %cst_26 = arith.constant dense<0.000000e+00> : vector<8x8xf32>
    %41 = tpu.matmul %36, %40, %cst_26 {dimension_numbers = #tpu.dot_dimension_numbers<[1], [0], [0], [1], [0, 0, 1, 1], [], []>} : vector<8x8xbf16>, vector<8x8xbf16>, vector<8x8xf32> -> vector<8x8xf32>
    %42 = tpu.reciprocal %39 {approx = true} : vector<8x1xf32> -> vector<8x1xf32>
    %43 = vector.broadcast %42 : vector<8x1xf32> to vector<8x8xf32>
    %44 = arith.mulf %41, %43 : vector<8x8xf32>
    %c0_27 = arith.constant 0 : index
    %c0_28 = arith.constant 0 : index
    %45 = vector.load %arg16[%c0_27, %c0_28] : memref<8x32xf32, #tpu.memory_space<vmem>>, vector<8x8xf32>
    tpu.vector_store %arg16[%c0_27, %c0_28], %44 {strides = array<i32>} : memref<8x32xf32, #tpu.memory_space<vmem>>, vector<8x8xf32>,
    %46 = vector.extract_strided_slice %21 {offsets = [0, 8], sizes = [8, 8], strides = [1, 1]} : vector<8x32xbf16> to vector<8x8xbf16>
    %47 = vector.extract_strided_slice %22 {offsets = [0, 8], sizes = [8, 8], strides = [1, 1]} : vector<8x32xbf16> to vector<8x8xbf16>
    %cst_29 = arith.constant dense<0.000000e+00> : vector<8x8xf32>
    %48 = tpu.matmul %46, %47, %cst_29 {dimension_numbers = #tpu.dot_dimension_numbers<[1], [1], [0], [0], [0, 0, 1, 0], [], []>} : vector<8x8xbf16>, vector<8x8xbf16>, vector<8x8xf32> -> vector<8x8xf32>
    %cst_30 = arith.constant 0.353553385 : f32
    %49 = vector.broadcast %cst_30 : f32 to vector<8x8xf32>
    %50 = arith.mulf %48, %49 : vector<8x8xf32>
    %51 = vector.broadcast %5 : vector<1x8xf32> to vector<8x8xf32>
    %52 = arith.addf %50, %51 : vector<8x8xf32>
    %cst_31 = arith.constant dense<0xFF800000> : vector<8xf32>
    %53 = vector.multi_reduction <maximumf>, %52, %cst_31 [1] : vector<8x8xf32> to vector<8xf32>
    %54 = vector.shape_cast %53 : vector<8xf32> to vector<8x1xf32>
    %55 = vector.broadcast %54 : vector<8x1xf32> to vector<8x8xf32>
    %56 = arith.subf %52, %55 : vector<8x8xf32>
    %57 = arith.truncf %56 : vector<8x8xf32> to vector<8x8xbf16>
    %58 = math.exp %57 : vector<8x8xbf16>
    %59 = arith.extf %58 : vector<8x8xbf16> to vector<8x8xf32>
    %cst_32 = arith.constant dense<0.000000e+00> : vector<8xf32>
    %60 = vector.multi_reduction <add>, %59, %cst_32 [1] : vector<8x8xf32> to vector<8xf32>
    %61 = vector.shape_cast %60 : vector<8xf32> to vector<8x1xf32>
    %62 = vector.extract_strided_slice %23 {offsets = [0, 8], sizes = [8, 8], strides = [1, 1]} : vector<8x32xbf16> to vector<8x8xbf16>
    %cst_33 = arith.constant dense<0.000000e+00> : vector<8x8xf32>
    %63 = tpu.matmul %58, %62, %cst_33 {dimension_numbers = #tpu.dot_dimension_numbers<[1], [0], [0], [1], [0, 0, 1, 1], [], []>} : vector<8x8xbf16>, vector<8x8xbf16>, vector<8x8xf32> -> vector<8x8xf32>
    %64 = tpu.reciprocal %61 {approx = true} : vector<8x1xf32> -> vector<8x1xf32>
    %65 = vector.broadcast %64 : vector<8x1xf32> to vector<8x8xf32>
    %66 = arith.mulf %63, %65 : vector<8x8xf32>
    %c0_34 = arith.constant 0 : index
    %c8 = arith.constant 8 : index
    %67 = vector.load %arg16[%c0_34, %c8] : memref<8x32xf32, #tpu.memory_space<vmem>>, vector<8x8xf32>
    tpu.vector_store %arg16[%c0_34, %c8], %66 {strides = array<i32>} : memref<8x32xf32, #tpu.memory_space<vmem>>, vector<8x8xf32>,
    %68 = vector.extract_strided_slice %21 {offsets = [0, 16], sizes = [8, 8], strides = [1, 1]} : vector<8x32xbf16> to vector<8x8xbf16>
    %69 = vector.extract_strided_slice %22 {offsets = [0, 16], sizes = [8, 8], strides = [1, 1]} : vector<8x32xbf16> to vector<8x8xbf16>
    %cst_35 = arith.constant dense<0.000000e+00> : vector<8x8xf32>
    %70 = tpu.matmul %68, %69, %cst_35 {dimension_numbers = #tpu.dot_dimension_numbers<[1], [1], [0], [0], [0, 0, 1, 0], [], []>} : vector<8x8xbf16>, vector<8x8xbf16>, vector<8x8xf32> -> vector<8x8xf32>
    %cst_36 = arith.constant 0.353553385 : f32
    %71 = vector.broadcast %cst_36 : f32 to vector<8x8xf32>
    %72 = arith.mulf %70, %71 : vector<8x8xf32>
    %73 = vector.broadcast %5 : vector<1x8xf32> to vector<8x8xf32>
    %74 = arith.addf %72, %73 : vector<8x8xf32>
    %cst_37 = arith.constant dense<0xFF800000> : vector<8xf32>
    %75 = vector.multi_reduction <maximumf>, %74, %cst_37 [1] : vector<8x8xf32> to vector<8xf32>
    %76 = vector.shape_cast %75 : vector<8xf32> to vector<8x1xf32>
    %77 = vector.broadcast %76 : vector<8x1xf32> to vector<8x8xf32>
    %78 = arith.subf %74, %77 : vector<8x8xf32>
    %79 = arith.truncf %78 : vector<8x8xf32> to vector<8x8xbf16>
    %80 = math.exp %79 : vector<8x8xbf16>
    %81 = arith.extf %80 : vector<8x8xbf16> to vector<8x8xf32>
    %cst_38 = arith.constant dense<0.000000e+00> : vector<8xf32>
    %82 = vector.multi_reduction <add>, %81, %cst_38 [1] : vector<8x8xf32> to vector<8xf32>
    %83 = vector.shape_cast %82 : vector<8xf32> to vector<8x1xf32>
    %84 = vector.extract_strided_slice %23 {offsets = [0, 16], sizes = [8, 8], strides = [1, 1]} : vector<8x32xbf16> to vector<8x8xbf16>
    %cst_39 = arith.constant dense<0.000000e+00> : vector<8x8xf32>
    %85 = tpu.matmul %80, %84, %cst_39 {dimension_numbers = #tpu.dot_dimension_numbers<[1], [0], [0], [1], [0, 0, 1, 1], [], []>} : vector<8x8xbf16>, vector<8x8xbf16>, vector<8x8xf32> -> vector<8x8xf32>
    %86 = tpu.reciprocal %83 {approx = true} : vector<8x1xf32> -> vector<8x1xf32>
    %87 = vector.broadcast %86 : vector<8x1xf32> to vector<8x8xf32>
    %88 = arith.mulf %85, %87 : vector<8x8xf32>
    %c0_40 = arith.constant 0 : index
    %c16 = arith.constant 16 : index
    %89 = vector.load %arg16[%c0_40, %c16] : memref<8x32xf32, #tpu.memory_space<vmem>>, vector<8x8xf32>
    tpu.vector_store %arg16[%c0_40, %c16], %88 {strides = array<i32>} : memref<8x32xf32, #tpu.memory_space<vmem>>, vector<8x8xf32>,
    %90 = vector.extract_strided_slice %21 {offsets = [0, 24], sizes = [8, 8], strides = [1, 1]} : vector<8x32xbf16> to vector<8x8xbf16>
    %91 = vector.extract_strided_slice %22 {offsets = [0, 24], sizes = [8, 8], strides = [1, 1]} : vector<8x32xbf16> to vector<8x8xbf16>
    %cst_41 = arith.constant dense<0.000000e+00> : vector<8x8xf32>
    %92 = tpu.matmul %90, %91, %cst_41 {dimension_numbers = #tpu.dot_dimension_numbers<[1], [1], [0], [0], [0, 0, 1, 0], [], []>} : vector<8x8xbf16>, vector<8x8xbf16>, vector<8x8xf32> -> vector<8x8xf32>
    %cst_42 = arith.constant 0.353553385 : f32
    %93 = vector.broadcast %cst_42 : f32 to vector<8x8xf32>
    %94 = arith.mulf %92, %93 : vector<8x8xf32>
    %95 = vector.broadcast %5 : vector<1x8xf32> to vector<8x8xf32>
    %96 = arith.addf %94, %95 : vector<8x8xf32>
    %cst_43 = arith.constant dense<0xFF800000> : vector<8xf32>
    %97 = vector.multi_reduction <maximumf>, %96, %cst_43 [1] : vector<8x8xf32> to vector<8xf32>
    %98 = vector.shape_cast %97 : vector<8xf32> to vector<8x1xf32>
    %99 = vector.broadcast %98 : vector<8x1xf32> to vector<8x8xf32>
    %100 = arith.subf %96, %99 : vector<8x8xf32>
    %101 = arith.truncf %100 : vector<8x8xf32> to vector<8x8xbf16>
    %102 = math.exp %101 : vector<8x8xbf16>
    %103 = arith.extf %102 : vector<8x8xbf16> to vector<8x8xf32>
    %cst_44 = arith.constant dense<0.000000e+00> : vector<8xf32>
    %104 = vector.multi_reduction <add>, %103, %cst_44 [1] : vector<8x8xf32> to vector<8xf32>
    %105 = vector.shape_cast %104 : vector<8xf32> to vector<8x1xf32>
    %106 = vector.extract_strided_slice %23 {offsets = [0, 24], sizes = [8, 8], strides = [1, 1]} : vector<8x32xbf16> to vector<8x8xbf16>
    %cst_45 = arith.constant dense<0.000000e+00> : vector<8x8xf32>
    %107 = tpu.matmul %102, %106, %cst_45 {dimension_numbers = #tpu.dot_dimension_numbers<[1], [0], [0], [1], [0, 0, 1, 1], [], []>} : vector<8x8xbf16>, vector<8x8xbf16>, vector<8x8xf32> -> vector<8x8xf32>
    %108 = tpu.reciprocal %105 {approx = true} : vector<8x1xf32> -> vector<8x1xf32>
    %109 = vector.broadcast %108 : vector<8x1xf32> to vector<8x8xf32>
    %110 = arith.mulf %107, %109 : vector<8x8xf32>
    %c0_46 = arith.constant 0 : index
    %c24 = arith.constant 24 : index
    %111 = vector.load %arg16[%c0_46, %c24] : memref<8x32xf32, #tpu.memory_space<vmem>>, vector<8x8xf32>
    tpu.vector_store %arg16[%c0_46, %c24], %110 {strides = array<i32>} : memref<8x32xf32, #tpu.memory_space<vmem>>, vector<8x8xf32>,
    %c0_47 = arith.constant 0 : index
    %c0_48 = arith.constant 0 : index
    %112 = vector.load %arg16[%c0_47, %c0_48] : memref<8x32xf32, #tpu.memory_space<vmem>>, vector<8x32xf32>
    %113 = arith.truncf %112 : vector<8x32xf32> to vector<8x32xbf16>
    %c0_49 = arith.constant 0 : index
    %c0_50 = arith.constant 0 : index
    %114 = vector.load %arg11[%c0_49, %c0_50] : memref<32x32xbf16, #tpu.memory_space<vmem>>, vector<32x32xbf16>
    %cst_51 = arith.constant dense<0.000000e+00> : vector<8x32xf32>
    %115 = tpu.matmul %113, %114, %cst_51 {dimension_numbers = #tpu.dot_dimension_numbers<[1], [0], [0], [1], [0, 0, 1, 1], [], []>} : vector<8x32xbf16>, vector<32x32xbf16>, vector<8x32xf32> -> vector<8x32xf32>
    %c0_52 = arith.constant 0 : index
    %c0_53 = arith.constant 0 : index
    %116 = vector.load %arg12[%c0_52, %c0_53] : memref<1x32xf32, #tpu.memory_space<vmem>>, vector<1x32xf32>
    %117 = vector.broadcast %116 : vector<1x32xf32> to vector<8x32xf32>
    %118 = arith.addf %115, %117 : vector<8x32xf32>
    %119 = arith.extf %1 : vector<8x32xbf16> to vector<8x32xf32>
    %120 = arith.addf %118, %119 : vector<8x32xf32>
    %cst_54 = arith.constant dense<0.000000e+00> : vector<8xf32>
    %121 = vector.multi_reduction <add>, %120, %cst_54 [1] : vector<8x32xf32> to vector<8xf32>
    %122 = vector.shape_cast %121 : vector<8xf32> to vector<8x1xf32>
    %cst_55 = arith.constant 3.200000e+01 : f32
    %123 = vector.broadcast %cst_55 : f32 to vector<8x1xf32>
    %124 = arith.divf %122, %123 : vector<8x1xf32>
    %125 = vector.broadcast %124 : vector<8x1xf32> to vector<8x32xf32>
    %126 = arith.subf %120, %125 : vector<8x32xf32>
    %127 = arith.mulf %126, %126 : vector<8x32xf32>
    %cst_56 = arith.constant dense<0.000000e+00> : vector<8xf32>
    %128 = vector.multi_reduction <add>, %127, %cst_56 [1] : vector<8x32xf32> to vector<8xf32>
    %129 = vector.shape_cast %128 : vector<8xf32> to vector<8x1xf32>
    %cst_57 = arith.constant 3.200000e+01 : f32
    %130 = vector.broadcast %cst_57 : f32 to vector<8x1xf32>
    %131 = arith.divf %129, %130 : vector<8x1xf32>
    %132 = vector.broadcast %124 : vector<8x1xf32> to vector<8x32xf32>
    %133 = arith.subf %120, %132 : vector<8x32xf32>
    %cst_58 = arith.constant 9.99999996E-13 : f32
    %134 = vector.broadcast %cst_58 : f32 to vector<8x1xf32>
    %135 = arith.addf %131, %134 : vector<8x1xf32>
    %136 = math.rsqrt %135 : vector<8x1xf32>
    %137 = vector.broadcast %136 : vector<8x1xf32> to vector<8x32xf32>
    %138 = arith.mulf %133, %137 : vector<8x32xf32>
    %c0_59 = arith.constant 0 : index
    %c0_60 = arith.constant 0 : index
    %139 = vector.load %arg13[%c0_59, %c0_60] : memref<1x32xf32, #tpu.memory_space<vmem>>, vector<1x32xf32>
    %140 = vector.broadcast %139 : vector<1x32xf32> to vector<8x32xf32>
    %141 = arith.mulf %138, %140 : vector<8x32xf32>
    %c0_61 = arith.constant 0 : index
    %c0_62 = arith.constant 0 : index
    %142 = vector.load %arg14[%c0_61, %c0_62] : memref<1x32xf32, #tpu.memory_space<vmem>>, vector<1x32xf32>
    %143 = vector.broadcast %142 : vector<1x32xf32> to vector<8x32xf32>
    %144 = arith.addf %141, %143 : vector<8x32xf32>
    %145 = arith.truncf %144 : vector<8x32xf32> to vector<8x32xbf16>
    %c0_63 = arith.constant 0 : index
    %c0_64 = arith.constant 0 : index
    %c0_65 = arith.constant 0 : index
    %146 = vector.load %arg15[%c0_63, %c0_64, %c0_65] : memref<1x8x32xbf16, #tpu.memory_space<vmem>>, vector<1x8x32xbf16>
    %147 = vector.shape_cast %146 : vector<1x8x32xbf16> to vector<8x32xbf16>
    %148 = vector.shape_cast %145 : vector<8x32xbf16> to vector<1x8x32xbf16>
    tpu.vector_store %arg15[%c0_63, %c0_64, %c0_65], %148 {strides = array<i32>} : memref<1x8x32xbf16, #tpu.memory_space<vmem>>, vector<1x8x32xbf16>,
    return
  }
  func.func @transform_0(%arg0: i32, %arg1: i32) -> (i32, i32, i32) {
    %c0_i32 = arith.constant 0 : i32
    %c0_i32_0 = arith.constant 0 : i32
    return %arg0, %arg1, %c0_i32 : i32, i32, i32
  }
  func.func @transform_1(%arg0: i32, %arg1: i32) -> (i32, i32, i32) {
    %c0_i32 = arith.constant 0 : i32
    %c0_i32_0 = arith.constant 0 : i32
    %c0_i32_1 = arith.constant 0 : i32
    return %arg0, %c0_i32, %c0_i32_0 : i32, i32, i32
  }
  func.func @transform_2(%arg0: i32, %arg1: i32) -> (i32, i32, i32) {
    %c0_i32 = arith.constant 0 : i32
    %c0_i32_0 = arith.constant 0 : i32
    %c0_i32_1 = arith.constant 0 : i32
    return %arg0, %c0_i32, %c0_i32_0 : i32, i32, i32
  }
  func.func @transform_3(%arg0: i32, %arg1: i32) -> (i32, i32) {
    %c0_i32 = arith.constant 0 : i32
    %c0_i32_0 = arith.constant 0 : i32
    %c0_i32_1 = arith.constant 0 : i32
    return %c0_i32, %c0_i32_0 : i32, i32
  }
  func.func @transform_4(%arg0: i32, %arg1: i32) -> (i32, i32) {
    %c0_i32 = arith.constant 0 : i32
    %c0_i32_0 = arith.constant 0 : i32
    %c0_i32_1 = arith.constant 0 : i32
    return %c0_i32, %c0_i32_0 : i32, i32
  }
  func.func @transform_5(%arg0: i32, %arg1: i32) -> (i32, i32) {
    %c0_i32 = arith.constant 0 : i32
    %c0_i32_0 = arith.constant 0 : i32
    %c0_i32_1 = arith.constant 0 : i32
    return %c0_i32, %c0_i32_0 : i32, i32
  }
  func.func @transform_6(%arg0: i32, %arg1: i32) -> (i32, i32) {
    %c0_i32 = arith.constant 0 : i32
    %c0_i32_0 = arith.constant 0 : i32
    %c0_i32_1 = arith.constant 0 : i32
    return %c0_i32, %c0_i32_0 : i32, i32
  }
  func.func @transform_7(%arg0: i32, %arg1: i32) -> (i32, i32) {
    %c0_i32 = arith.constant 0 : i32
    %c0_i32_0 = arith.constant 0 : i32
    %c0_i32_1 = arith.constant 0 : i32
    return %c0_i32, %c0_i32_0 : i32, i32
  }
  func.func @transform_8(%arg0: i32, %arg1: i32) -> (i32, i32) {
    %c0_i32 = arith.constant 0 : i32
    %c0_i32_0 = arith.constant 0 : i32
    %c0_i32_1 = arith.constant 0 : i32
    return %c0_i32, %c0_i32_0 : i32, i32
  }
  func.func @transform_9(%arg0: i32, %arg1: i32) -> (i32, i32) {
    %c0_i32 = arith.constant 0 : i32
    %c0_i32_0 = arith.constant 0 : i32
    %c0_i32_1 = arith.constant 0 : i32
    return %c0_i32, %c0_i32_0 : i32, i32
  }
  func.func @transform_10(%arg0: i32, %arg1: i32) -> (i32, i32) {
    %c0_i32 = arith.constant 0 : i32
    %c0_i32_0 = arith.constant 0 : i32
    %c0_i32_1 = arith.constant 0 : i32
    return %c0_i32, %c0_i32_0 : i32, i32
  }
  func.func @transform_11(%arg0: i32, %arg1: i32) -> (i32, i32) {
    %c0_i32 = arith.constant 0 : i32
    %c0_i32_0 = arith.constant 0 : i32
    %c0_i32_1 = arith.constant 0 : i32
    return %c0_i32, %c0_i32_0 : i32, i32
  }
  func.func @transform_12(%arg0: i32, %arg1: i32) -> (i32, i32) {
    %c0_i32 = arith.constant 0 : i32
    %c0_i32_0 = arith.constant 0 : i32
    %c0_i32_1 = arith.constant 0 : i32
    return %c0_i32, %c0_i32_0 : i32, i32
  }
  func.func @transform_13(%arg0: i32, %arg1: i32) -> (i32, i32, i32) {
    %c0_i32 = arith.constant 0 : i32
    %c0_i32_0 = arith.constant 0 : i32
    return %arg0, %arg1, %c0_i32 : i32, i32, i32
  }
}

module attributes {stable_mosaic.version = 11 : i64} {
  func.func @_ffn_ln_kernel(%arg0: i32, %arg1: memref<16x32xbf16, #tpu.memory_space<vmem>>, %arg2: memref<32x64xbf16, #tpu.memory_space<vmem>>, %arg3: memref<1x64xf32, #tpu.memory_space<vmem>>, %arg4: memref<64x32xbf16, #tpu.memory_space<vmem>>, %arg5: memref<1x32xf32, #tpu.memory_space<vmem>>, %arg6: memref<1x32xf32, #tpu.memory_space<vmem>>, %arg7: memref<1x32xf32, #tpu.memory_space<vmem>>, %arg8: memref<16x32xbf16, #tpu.memory_space<vmem>>) attributes {dimension_semantics = [#tpu.dimension_semantics<parallel>], iteration_bounds = array<i64: 1>, scalar_prefetch = 0 : i64, scratch_operands = 0 : i64, tpu.core_type = #tpu.core_type<tc>, window_params = [{transform_indices = @transform_0, window_bounds = array<i64: 16, 32>}, {pipeline_mode = #tpu.pipeline_mode<synchronous>, transform_indices = @transform_1, window_bounds = array<i64: 32, 64>}, {pipeline_mode = #tpu.pipeline_mode<synchronous>, transform_indices = @transform_2, window_bounds = array<i64: 1, 64>}, {pipeline_mode = #tpu.pipeline_mode<synchronous>, transform_indices = @transform_3, window_bounds = array<i64: 64, 32>}, {pipeline_mode = #tpu.pipeline_mode<synchronous>, transform_indices = @transform_4, window_bounds = array<i64: 1, 32>}, {pipeline_mode = #tpu.pipeline_mode<synchronous>, transform_indices = @transform_5, window_bounds = array<i64: 1, 32>}, {pipeline_mode = #tpu.pipeline_mode<synchronous>, transform_indices = @transform_6, window_bounds = array<i64: 1, 32>}, {transform_indices = @transform_7, window_bounds = array<i64: 16, 32>}]} {
    %c0 = arith.constant 0 : index
    %c0_0 = arith.constant 0 : index
    %0 = vector.load %arg1[%c0, %c0_0] : memref<16x32xbf16, #tpu.memory_space<vmem>>, vector<16x32xbf16>
    %c0_1 = arith.constant 0 : index
    %c0_2 = arith.constant 0 : index
    %1 = vector.load %arg2[%c0_1, %c0_2] : memref<32x64xbf16, #tpu.memory_space<vmem>>, vector<32x64xbf16>
    %cst = arith.constant dense<0.000000e+00> : vector<16x64xf32>
    %2 = tpu.matmul %0, %1, %cst {dimension_numbers = #tpu.dot_dimension_numbers<[1], [0], [0], [1], [0, 0, 1, 1], [], []>} : vector<16x32xbf16>, vector<32x64xbf16>, vector<16x64xf32> -> vector<16x64xf32>
    %c0_3 = arith.constant 0 : index
    %c0_4 = arith.constant 0 : index
    %3 = vector.load %arg3[%c0_3, %c0_4] : memref<1x64xf32, #tpu.memory_space<vmem>>, vector<1x64xf32>
    %4 = vector.broadcast %3 : vector<1x64xf32> to vector<16x64xf32>
    %5 = arith.addf %2, %4 : vector<16x64xf32>
    %6 = arith.truncf %5 : vector<16x64xf32> to vector<16x64xbf16>
    %7 = arith.mulf %6, %6 : vector<16x64xbf16>
    %8 = arith.mulf %6, %7 : vector<16x64xbf16>
    %cst_5 = arith.constant 4.467770e-02 : bf16
    %9 = vector.broadcast %cst_5 : bf16 to vector<16x64xbf16>
    %10 = arith.mulf %9, %8 : vector<16x64xbf16>
    %11 = arith.addf %6, %10 : vector<16x64xbf16>
    %cst_6 = arith.constant 7.968750e-01 : bf16
    %12 = vector.broadcast %cst_6 : bf16 to vector<16x64xbf16>
    %13 = arith.mulf %12, %11 : vector<16x64xbf16>
    %14 = math.tanh %13 : vector<16x64xbf16>
    %cst_7 = arith.constant 1.000000e+00 : bf16
    %15 = vector.broadcast %cst_7 : bf16 to vector<16x64xbf16>
    %16 = arith.addf %15, %14 : vector<16x64xbf16>
    %cst_8 = arith.constant 5.000000e-01 : bf16
    %17 = vector.broadcast %cst_8 : bf16 to vector<16x64xbf16>
    %18 = arith.mulf %17, %16 : vector<16x64xbf16>
    %19 = arith.mulf %6, %18 : vector<16x64xbf16>
    %c0_9 = arith.constant 0 : index
    %c0_10 = arith.constant 0 : index
    %20 = vector.load %arg4[%c0_9, %c0_10] : memref<64x32xbf16, #tpu.memory_space<vmem>>, vector<64x32xbf16>
    %cst_11 = arith.constant dense<0.000000e+00> : vector<16x32xf32>
    %21 = tpu.matmul %19, %20, %cst_11 {dimension_numbers = #tpu.dot_dimension_numbers<[1], [0], [0], [1], [0, 0, 1, 1], [], []>} : vector<16x64xbf16>, vector<64x32xbf16>, vector<16x32xf32> -> vector<16x32xf32>
    %c0_12 = arith.constant 0 : index
    %c0_13 = arith.constant 0 : index
    %22 = vector.load %arg5[%c0_12, %c0_13] : memref<1x32xf32, #tpu.memory_space<vmem>>, vector<1x32xf32>
    %23 = vector.broadcast %22 : vector<1x32xf32> to vector<16x32xf32>
    %24 = arith.addf %21, %23 : vector<16x32xf32>
    %25 = arith.extf %0 : vector<16x32xbf16> to vector<16x32xf32>
    %26 = arith.addf %24, %25 : vector<16x32xf32>
    %cst_14 = arith.constant dense<0.000000e+00> : vector<16xf32>
    %27 = vector.multi_reduction <add>, %26, %cst_14 [1] : vector<16x32xf32> to vector<16xf32>
    %28 = vector.shape_cast %27 : vector<16xf32> to vector<16x1xf32>
    %cst_15 = arith.constant 3.200000e+01 : f32
    %29 = vector.broadcast %cst_15 : f32 to vector<16x1xf32>
    %30 = arith.divf %28, %29 : vector<16x1xf32>
    %31 = vector.broadcast %30 : vector<16x1xf32> to vector<16x32xf32>
    %32 = arith.subf %26, %31 : vector<16x32xf32>
    %33 = arith.mulf %32, %32 : vector<16x32xf32>
    %cst_16 = arith.constant dense<0.000000e+00> : vector<16xf32>
    %34 = vector.multi_reduction <add>, %33, %cst_16 [1] : vector<16x32xf32> to vector<16xf32>
    %35 = vector.shape_cast %34 : vector<16xf32> to vector<16x1xf32>
    %cst_17 = arith.constant 3.200000e+01 : f32
    %36 = vector.broadcast %cst_17 : f32 to vector<16x1xf32>
    %37 = arith.divf %35, %36 : vector<16x1xf32>
    %38 = vector.broadcast %30 : vector<16x1xf32> to vector<16x32xf32>
    %39 = arith.subf %26, %38 : vector<16x32xf32>
    %cst_18 = arith.constant 9.99999996E-13 : f32
    %40 = vector.broadcast %cst_18 : f32 to vector<16x1xf32>
    %41 = arith.addf %37, %40 : vector<16x1xf32>
    %42 = math.rsqrt %41 : vector<16x1xf32>
    %43 = vector.broadcast %42 : vector<16x1xf32> to vector<16x32xf32>
    %44 = arith.mulf %39, %43 : vector<16x32xf32>
    %c0_19 = arith.constant 0 : index
    %c0_20 = arith.constant 0 : index
    %45 = vector.load %arg6[%c0_19, %c0_20] : memref<1x32xf32, #tpu.memory_space<vmem>>, vector<1x32xf32>
    %46 = vector.broadcast %45 : vector<1x32xf32> to vector<16x32xf32>
    %47 = arith.mulf %44, %46 : vector<16x32xf32>
    %c0_21 = arith.constant 0 : index
    %c0_22 = arith.constant 0 : index
    %48 = vector.load %arg7[%c0_21, %c0_22] : memref<1x32xf32, #tpu.memory_space<vmem>>, vector<1x32xf32>
    %49 = vector.broadcast %48 : vector<1x32xf32> to vector<16x32xf32>
    %50 = arith.addf %47, %49 : vector<16x32xf32>
    %51 = arith.truncf %50 : vector<16x32xf32> to vector<16x32xbf16>
    %c0_23 = arith.constant 0 : index
    %c0_24 = arith.constant 0 : index
    %52 = vector.load %arg8[%c0_23, %c0_24] : memref<16x32xbf16, #tpu.memory_space<vmem>>, vector<16x32xbf16>
    tpu.vector_store %arg8[%c0_23, %c0_24], %51 {strides = array<i32>} : memref<16x32xbf16, #tpu.memory_space<vmem>>, vector<16x32xbf16>,
    return
  }
  func.func @transform_0(%arg0: i32) -> (i32, i32) {
    %c0_i32 = arith.constant 0 : i32
    %c0_i32_0 = arith.constant 0 : i32
    return %arg0, %c0_i32 : i32, i32
  }
  func.func @transform_1(%arg0: i32) -> (i32, i32) {
    %c0_i32 = arith.constant 0 : i32
    %c0_i32_0 = arith.constant 0 : i32
    %c0_i32_1 = arith.constant 0 : i32
    return %c0_i32, %c0_i32_0 : i32, i32
  }
  func.func @transform_2(%arg0: i32) -> (i32, i32) {
    %c0_i32 = arith.constant 0 : i32
    %c0_i32_0 = arith.constant 0 : i32
    %c0_i32_1 = arith.constant 0 : i32
    return %c0_i32, %c0_i32_0 : i32, i32
  }
  func.func @transform_3(%arg0: i32) -> (i32, i32) {
    %c0_i32 = arith.constant 0 : i32
    %c0_i32_0 = arith.constant 0 : i32
    %c0_i32_1 = arith.constant 0 : i32
    return %c0_i32, %c0_i32_0 : i32, i32
  }
  func.func @transform_4(%arg0: i32) -> (i32, i32) {
    %c0_i32 = arith.constant 0 : i32
    %c0_i32_0 = arith.constant 0 : i32
    %c0_i32_1 = arith.constant 0 : i32
    return %c0_i32, %c0_i32_0 : i32, i32
  }
  func.func @transform_5(%arg0: i32) -> (i32, i32) {
    %c0_i32 = arith.constant 0 : i32
    %c0_i32_0 = arith.constant 0 : i32
    %c0_i32_1 = arith.constant 0 : i32
    return %c0_i32, %c0_i32_0 : i32, i32
  }
  func.func @transform_6(%arg0: i32) -> (i32, i32) {
    %c0_i32 = arith.constant 0 : i32
    %c0_i32_0 = arith.constant 0 : i32
    %c0_i32_1 = arith.constant 0 : i32
    return %c0_i32, %c0_i32_0 : i32, i32
  }
  func.func @transform_7(%arg0: i32) -> (i32, i32) {
    %c0_i32 = arith.constant 0 : i32
    %c0_i32_0 = arith.constant 0 : i32
    return %arg0, %c0_i32 : i32, i32
  }
}

module attributes {stable_mosaic.version = 11 : i64} {
  func.func @_cls_ce_kernel(%arg0: i32, %arg1: memref<16x32xbf16, #tpu.memory_space<vmem>>, %arg2: memref<32x128xbf16, #tpu.memory_space<vmem>>, %arg3: memref<1x128xf32, #tpu.memory_space<vmem>>, %arg4: memref<16x1xi32, #tpu.memory_space<vmem>>, %arg5: memref<16x128xf32, #tpu.memory_space<vmem>>, %arg6: memref<1x1xf32, #tpu.memory_space<smem>>, %arg7: memref<2xf32, #tpu.memory_space<smem>>) attributes {dimension_semantics = [#tpu.dimension_semantics<arbitrary>], iteration_bounds = array<i64: 1>, scalar_prefetch = 0 : i64, scratch_operands = 1 : i64, tpu.core_type = #tpu.core_type<tc>, window_params = [{transform_indices = @transform_0, window_bounds = array<i64: 16, 32>}, {pipeline_mode = #tpu.pipeline_mode<synchronous>, transform_indices = @transform_1, window_bounds = array<i64: 32, 128>}, {pipeline_mode = #tpu.pipeline_mode<synchronous>, transform_indices = @transform_2, window_bounds = array<i64: 1, 128>}, {transform_indices = @transform_3, window_bounds = array<i64: 16, 1>}, {transform_indices = @transform_4, window_bounds = array<i64: 16, 128>}, {transform_indices = @transform_5, window_bounds = array<i64: 1, 1>}]} {
    %c0_i32 = arith.constant 0 : i32
    %0 = arith.cmpi eq, %arg0, %c0_i32 : i32
    %1 = arith.extui %0 : i1 to i32
    %c0_i32_0 = arith.constant 0 : i32
    %2 = arith.cmpi ne, %1, %c0_i32_0 : i32
    scf.if %2 {
      %cst_22 = arith.constant 0.000000e+00 : f32
      %c0_23 = arith.constant 0 : index
      %54 = memref.load %arg7[%c0_23] : memref<2xf32, #tpu.memory_space<smem>>
      memref.store %cst_22, %arg7[%c0_23] : memref<2xf32, #tpu.memory_space<smem>>
      %cst_24 = arith.constant 0.000000e+00 : f32
      %c1_25 = arith.constant 1 : index
      %55 = memref.load %arg7[%c1_25] : memref<2xf32, #tpu.memory_space<smem>>
      memref.store %cst_24, %arg7[%c1_25] : memref<2xf32, #tpu.memory_space<smem>>
    } else {
    }
    %c0 = arith.constant 0 : index
    %c0_1 = arith.constant 0 : index
    %3 = vector.load %arg1[%c0, %c0_1] : memref<16x32xbf16, #tpu.memory_space<vmem>>, vector<16x32xbf16>
    %c0_2 = arith.constant 0 : index
    %c0_3 = arith.constant 0 : index
    %4 = vector.load %arg2[%c0_2, %c0_3] : memref<32x128xbf16, #tpu.memory_space<vmem>>, vector<32x128xbf16>
    %cst = arith.constant dense<0.000000e+00> : vector<16x128xf32>
    %5 = tpu.matmul %3, %4, %cst {dimension_numbers = #tpu.dot_dimension_numbers<[1], [0], [0], [1], [0, 0, 1, 1], [], []>} : vector<16x32xbf16>, vector<32x128xbf16>, vector<16x128xf32> -> vector<16x128xf32>
    %c0_4 = arith.constant 0 : index
    %c0_5 = arith.constant 0 : index
    %6 = vector.load %arg3[%c0_4, %c0_5] : memref<1x128xf32, #tpu.memory_space<vmem>>, vector<1x128xf32>
    %7 = vector.broadcast %6 : vector<1x128xf32> to vector<16x128xf32>
    %8 = arith.addf %5, %7 : vector<16x128xf32>
    %c0_6 = arith.constant 0 : index
    %c0_7 = arith.constant 0 : index
    %9 = vector.load %arg5[%c0_6, %c0_7] : memref<16x128xf32, #tpu.memory_space<vmem>>, vector<16x128xf32>
    tpu.vector_store %arg5[%c0_6, %c0_7], %8 {strides = array<i32>} : memref<16x128xf32, #tpu.memory_space<vmem>>, vector<16x128xf32>,
    %c0_8 = arith.constant 0 : index
    %c0_9 = arith.constant 0 : index
    %10 = vector.load %arg4[%c0_8, %c0_9] : memref<16x1xi32, #tpu.memory_space<vmem>>, vector<16x1xi32>
    %cst_10 = arith.constant dense<0xFF800000> : vector<16xf32>
    %11 = vector.multi_reduction <maximumf>, %8, %cst_10 [1] : vector<16x128xf32> to vector<16xf32>
    %12 = vector.shape_cast %11 : vector<16xf32> to vector<16x1xf32>
    %13 = vector.broadcast %12 : vector<16x1xf32> to vector<16x128xf32>
    %14 = arith.subf %8, %13 : vector<16x128xf32>
    %15 = math.exp %14 : vector<16x128xf32>
    %cst_11 = arith.constant dense<0.000000e+00> : vector<16xf32>
    %16 = vector.multi_reduction <add>, %15, %cst_11 [1] : vector<16x128xf32> to vector<16xf32>
    %17 = vector.shape_cast %16 : vector<16xf32> to vector<16x1xf32>
    %18 = math.log %17 : vector<16x1xf32>
    %19 = arith.addf %18, %12 : vector<16x1xf32>
    %20 = vector.broadcast %19 : vector<16x1xf32> to vector<16x128xf32>
    %21 = arith.subf %8, %20 : vector<16x128xf32>
    %22 = tpu.iota {dimensions = array<i32: 1>} : vector<16x128xi32>
    %23 = vector.broadcast %10 : vector<16x1xi32> to vector<16x128xi32>
    %24 = arith.cmpi eq, %22, %23 : vector<16x128xi32>
    %25 = arith.extui %24 : vector<16x128xi1> to vector<16x128xi32>
    %26 = arith.sitofp %25 : vector<16x128xi32> to vector<16x128xf32>
    %27 = arith.mulf %26, %21 : vector<16x128xf32>
    %cst_12 = arith.constant dense<0.000000e+00> : vector<16xf32>
    %28 = vector.multi_reduction <add>, %27, %cst_12 [1] : vector<16x128xf32> to vector<16xf32>
    %29 = vector.shape_cast %28 : vector<16xf32> to vector<16x1xf32>
    %cst_13 = arith.constant 0.000000e+00 : f32
    %30 = vector.broadcast %cst_13 : f32 to vector<16x1xf32>
    %31 = arith.subf %30, %29 : vector<16x1xf32>
    %c0_i32_14 = arith.constant 0 : i32
    %32 = vector.broadcast %c0_i32_14 : i32 to vector<16x1xi32>
    %33 = arith.cmpi ne, %10, %32 : vector<16x1xi32>
    %34 = arith.extui %33 : vector<16x1xi1> to vector<16x1xi32>
    %35 = arith.sitofp %34 : vector<16x1xi32> to vector<16x1xf32>
    %c0_15 = arith.constant 0 : index
    %36 = memref.load %arg7[%c0_15] : memref<2xf32, #tpu.memory_space<smem>>
    %37 = arith.mulf %31, %35 : vector<16x1xf32>
    %38 = vector.shape_cast %37 : vector<16x1xf32> to vector<1x16x1xf32>
    %cst_16 = arith.constant dense<0.000000e+00> : vector<1xf32>
    %39 = vector.multi_reduction <add>, %38, %cst_16 [1, 2] : vector<1x16x1xf32> to vector<1xf32>
    %40 = vector.shape_cast %39 : vector<1xf32> to vector<1x1x1xf32>
    %41 = vector.extract %40[0, 0, 0] : f32 from vector<1x1x1xf32>
    %42 = arith.addf %36, %41 : f32
    %c0_17 = arith.constant 0 : index
    %43 = memref.load %arg7[%c0_17] : memref<2xf32, #tpu.memory_space<smem>>
    memref.store %42, %arg7[%c0_17] : memref<2xf32, #tpu.memory_space<smem>>
    %c1 = arith.constant 1 : index
    %44 = memref.load %arg7[%c1] : memref<2xf32, #tpu.memory_space<smem>>
    %45 = vector.shape_cast %35 : vector<16x1xf32> to vector<1x16x1xf32>
    %cst_18 = arith.constant dense<0.000000e+00> : vector<1xf32>
    %46 = vector.multi_reduction <add>, %45, %cst_18 [1, 2] : vector<1x16x1xf32> to vector<1xf32>
    %47 = vector.shape_cast %46 : vector<1xf32> to vector<1x1x1xf32>
    %48 = vector.extract %47[0, 0, 0] : f32 from vector<1x1x1xf32>
    %49 = arith.addf %44, %48 : f32
    %c1_19 = arith.constant 1 : index
    %50 = memref.load %arg7[%c1_19] : memref<2xf32, #tpu.memory_space<smem>>
    memref.store %49, %arg7[%c1_19] : memref<2xf32, #tpu.memory_space<smem>>
    %c0_i32_20 = arith.constant 0 : i32
    %51 = arith.cmpi eq, %arg0, %c0_i32_20 : i32
    %52 = arith.extui %51 : i1 to i32
    %c0_i32_21 = arith.constant 0 : i32
    %53 = arith.cmpi ne, %52, %c0_i32_21 : i32
    scf.if %53 {
      %c0_22 = arith.constant 0 : index
      %54 = memref.load %arg7[%c0_22] : memref<2xf32, #tpu.memory_space<smem>>
      %c1_23 = arith.constant 1 : index
      %55 = memref.load %arg7[%c1_23] : memref<2xf32, #tpu.memory_space<smem>>
      %cst_24 = arith.constant 1.000000e+00 : f32
      %56 = arith.maximumf %55, %cst_24 : f32
      %57 = arith.divf %54, %56 : f32
      %c0_25 = arith.constant 0 : index
      %c0_26 = arith.constant 0 : index
      %58 = memref.load %arg6[%c0_25, %c0_26] : memref<1x1xf32, #tpu.memory_space<smem>>
      memref.store %57, %arg6[%c0_25, %c0_26] : memref<1x1xf32, #tpu.memory_space<smem>>
    } else {
    }
    return
  }
  func.func @transform_0(%arg0: i32) -> (i32, i32) {
    %c0_i32 = arith.constant 0 : i32
    %c0_i32_0 = arith.constant 0 : i32
    return %arg0, %c0_i32 : i32, i32
  }
  func.func @transform_1(%arg0: i32) -> (i32, i32) {
    %c0_i32 = arith.constant 0 : i32
    %c0_i32_0 = arith.constant 0 : i32
    %c0_i32_1 = arith.constant 0 : i32
    return %c0_i32, %c0_i32_0 : i32, i32
  }
  func.func @transform_2(%arg0: i32) -> (i32, i32) {
    %c0_i32 = arith.constant 0 : i32
    %c0_i32_0 = arith.constant 0 : i32
    %c0_i32_1 = arith.constant 0 : i32
    return %c0_i32, %c0_i32_0 : i32, i32
  }
  func.func @transform_3(%arg0: i32) -> (i32, i32) {
    %c0_i32 = arith.constant 0 : i32
    %c0_i32_0 = arith.constant 0 : i32
    return %arg0, %c0_i32 : i32, i32
  }
  func.func @transform_4(%arg0: i32) -> (i32, i32) {
    %c0_i32 = arith.constant 0 : i32
    %c0_i32_0 = arith.constant 0 : i32
    return %arg0, %c0_i32 : i32, i32
  }
  func.func @transform_5(%arg0: i32) -> (i32, i32) {
    %c0_i32 = arith.constant 0 : i32
    %c0_i32_0 = arith.constant 0 : i32
    %c0_i32_1 = arith.constant 0 : i32
    return %c0_i32, %c0_i32_0 : i32, i32
  }
}

</mosaic_0001>

<llo_original>
// kernel: bert_softmax_for_ner_forward.6
$region0: #{bert_softmax_for_ner_forward.6}
  #allocation0 [shape = 'u32[]', space=smem, size = 0x4, offset = 0x4, fixed_abs, tag = 'smem constant byte address 0x4 - core index']
  #allocation1 [shape = 'u32[144,128]{1,0:T(1,128)}', space=vmem, size = 0x12000, scoped, tag = 'internal scratch']
  %s0 = inlined_call_operand.vmem [shape: bf16[16,32], index: 0, kind: input, shape index: {}]
  %s1 = inlined_call_operand.vmem [shape: f32[1,32], index: 1, kind: input, shape index: {}]
  %s2 = inlined_call_operand.vmem [shape: f32[1,32], index: 2, kind: input, shape index: {}]
  %s3 = inlined_call_operand.vmem [shape: bf16[16,32], index: 3, kind: output, shape index: {}]
  %s4 = sld [smem:[#allocation0]]
  $region22: #{bert_softmax_for_ner_forward.6} parent=0
    _
  %s6 = ssub.s32 1, %s4
  %s7 = scalar_select 0, %s6, %s4
  // Predicated region
  $region2: #{bert_softmax_for_ner_forward.6} parent=0 // pred_check
    _
  $region3: #{bert_softmax_for_ner_forward.6} parent=0 // pred_check_branch
    %9 = sbr.rel (0) target = $region5
  $region4: #{bert_softmax_for_ner_forward.6} parent=0 // pred_region
    _
  $region5: #{bert_softmax_for_ner_forward.6} parent=0 // pred_fallthru
    _
  // Predicated region
  $region6: #{bert_softmax_for_ner_forward.6} parent=0 // pred_check
    _
  $region7: #{bert_softmax_for_ner_forward.6} parent=0 // pred_check_branch
    %11 = sbr.rel (0) target = $region9
  $region8: #{bert_softmax_for_ner_forward.6} parent=0 // pred_region
    _
  $region9: #{bert_softmax_for_ner_forward.6} parent=0 // pred_fallthru
    _
  // Predicated region
  $region10: #{bert_softmax_for_ner_forward.6} parent=0 // pred_check
    _
  $region11: #{bert_softmax_for_ner_forward.6} parent=0 // pred_check_branch
    %13 = sbr.rel (0) target = $region13
  $region12: #{bert_softmax_for_ner_forward.6} parent=0 // pred_region
    _
  $region13: #{bert_softmax_for_ner_forward.6} parent=0 // pred_fallthru
    _
  %v14 = vld [vmem:[%s0] sm:$0xf]
  %v15 = vld [vmem:[%s0 + $0x4] sm:$0xf]
  %v16 = vunpack.c.l.bf16 %v14
  %v17 = vunpack.c.l.bf16 %v15
  %vm18 = vcmask 261120
  %v19 = vsel %vm18, %v16, 0.0
  %20 = vadd.xlane.f32.xlu0 %v19
  %v21 = vpop.xlane.xlu0 %20
  %v22 = vsel %vm18, %v17, 0.0
  %23 = vadd.xlane.f32.xlu0 %v22
  %v24 = vpop.xlane.xlu0 %23
  %v25 = vrcp.pop 32.0
  %v26 = vmul.f32 %v21, %v25
  %v27 = vmul.f32 %v24, %v25
  %v28 = vsub.f32 %v16, %v26
  %v29 = vsub.f32 %v17, %v27
  %v30 = vmul.f32 %v28, %v28
  %v31 = vmul.f32 %v29, %v29
  %v32 = vsel %vm18, %v30, 0.0
  %33 = vadd.xlane.f32.xlu0 %v32
  %v34 = vpop.xlane.xlu0 %33
  %v35 = vsel %vm18, %v31, 0.0
  %36 = vadd.xlane.f32.xlu0 %v35
  %v37 = vpop.xlane.xlu0 %36
  %v38 = vmul.f32 %v34, %v25
  %v39 = vmul.f32 %v37, %v25
  %v40 = vadd.f32 %v38, 1e-12
  %v41 = vadd.f32 %v39, 1e-12
  %v42 = vrsqrt.pop %v40
  %v43 = vrsqrt.pop %v41
  %v44 = vmul.f32 %v28, %v42
  %v45 = vmul.f32 %v29, %v43
  %v46 = vld [vmem:[%s1] sm:$0x1]
  %v48 = vlaneseq
  %v49 = vshrl.u32 %v48, 7
  %v50 = vsub.s32 0, %v49
  %v51 = vrot.slane %v46, %v50
  %v53 = vmul.f32 %v44, %v51
  %v54 = vmul.f32 %v45, %v51
  %v55 = vld [vmem:[%s2] sm:$0x1]
  %v57 = vlaneseq
  %v58 = vshrl.u32 %v57, 7
  %v59 = vsub.s32 0, %v58
  %v60 = vrot.slane %v55, %v59
  %v62 = vadd.f32 %v53, %v60
  %v63 = vadd.f32 %v54, %v60
  %v64 = vpack.c.bf16 %v63, %v62
  %v66 = vunpack.c.l.b16 %v64
  %v67 = vunpack.c.h.b16 %v64
  %v68 = vpack.c.b16 %v66, %v66
  %v69 = vpack.c.b16 %v67, %v67
  %vm72 = vcmask 257024
  %73 = vst.msk [vmem:[%s3] sm:$0xf] %vm72, %v68
  %74 = vst.msk [vmem:[%s3 + $0x4] sm:$0xf] %vm72, %v69
  // Predicated region
  $region14: #{bert_softmax_for_ner_forward.6} parent=0 // pred_check
    _
  $region15: #{bert_softmax_for_ner_forward.6} parent=0 // pred_check_branch
    %76 = sbr.rel (0) target = $region17
  $region16: #{bert_softmax_for_ner_forward.6} parent=0 // pred_region
    _
  $region17: #{bert_softmax_for_ner_forward.6} parent=0 // pred_fallthru
    _
  // Predicated region
  $region18: #{bert_softmax_for_ner_forward.6} parent=0 // pred_check
    _
  $region19: #{bert_softmax_for_ner_forward.6} parent=0 // pred_check_branch
    %78 = sbr.rel (0) target = $region21
  $region20: #{bert_softmax_for_ner_forward.6} parent=0 // pred_region
    _
  $region21: #{bert_softmax_for_ner_forward.6} parent=0 // pred_fallthru
    _

// kernel: bert_softmax_for_ner_forward.8
$region0: #{bert_softmax_for_ner_forward.8}
  #allocation0 [shape = 'u32[]', space=smem, size = 0x4, offset = 0x4, fixed_abs, tag = 'smem constant byte address 0x4 - core index']
  #allocation1 [shape = 'u32[144,128]{1,0:T(1,128)}', space=vmem, size = 0x12000, scoped, tag = 'internal scratch']
  %s0 = inlined_call_operand.vmem [shape: bf16[16,32], index: 0, kind: input, shape index: {}]
  %s1 = inlined_call_operand.vmem [shape: bf16[32,64], index: 1, kind: input, shape index: {}]
  %s2 = inlined_call_operand.vmem [shape: f32[1,64], index: 2, kind: input, shape index: {}]
  %s3 = inlined_call_operand.vmem [shape: bf16[64,32], index: 3, kind: input, shape index: {}]
  %s4 = inlined_call_operand.vmem [shape: f32[1,32], index: 4, kind: input, shape index: {}]
  %s5 = inlined_call_operand.vmem [shape: f32[1,32], index: 5, kind: input, shape index: {}]
  %s6 = inlined_call_operand.vmem [shape: f32[1,32], index: 6, kind: input, shape index: {}]
  %s7 = inlined_call_operand.vmem [shape: bf16[16,32], index: 7, kind: output, shape index: {}]
  %s8 = sld [smem:[#allocation0]]
  $region38: #{bert_softmax_for_ner_forward.8} parent=0
    _
  %s10 = ssub.s32 1, %s8
  %s11 = scalar_select 0, %s10, %s8
  // Predicated region
  $region2: #{bert_softmax_for_ner_forward.8} parent=0 // pred_check
    _
  $region3: #{bert_softmax_for_ner_forward.8} parent=0 // pred_check_branch
    %13 = sbr.rel (0) target = $region5
  $region4: #{bert_softmax_for_ner_forward.8} parent=0 // pred_region
    _
  $region5: #{bert_softmax_for_ner_forward.8} parent=0 // pred_fallthru
    _
  // Predicated region
  $region6: #{bert_softmax_for_ner_forward.8} parent=0 // pred_check
    _
  $region7: #{bert_softmax_for_ner_forward.8} parent=0 // pred_check_branch
    %15 = sbr.rel (0) target = $region9
  $region8: #{bert_softmax_for_ner_forward.8} parent=0 // pred_region
    _
  $region9: #{bert_softmax_for_ner_forward.8} parent=0 // pred_fallthru
    _
  // Predicated region
  $region10: #{bert_softmax_for_ner_forward.8} parent=0 // pred_check
    _
  $region11: #{bert_softmax_for_ner_forward.8} parent=0 // pred_check_branch
    %17 = sbr.rel (0) target = $region13
  $region12: #{bert_softmax_for_ner_forward.8} parent=0 // pred_region
    _
  $region13: #{bert_softmax_for_ner_forward.8} parent=0 // pred_fallthru
    _
  // Predicated region
  $region14: #{bert_softmax_for_ner_forward.8} parent=0 // pred_check
    _
  $region15: #{bert_softmax_for_ner_forward.8} parent=0 // pred_check_branch
    %19 = sbr.rel (0) target = $region17
  $region16: #{bert_softmax_for_ner_forward.8} parent=0 // pred_region
    _
  $region17: #{bert_softmax_for_ner_forward.8} parent=0 // pred_fallthru
    _
  // Predicated region
  $region18: #{bert_softmax_for_ner_forward.8} parent=0 // pred_check
    _
  $region19: #{bert_softmax_for_ner_forward.8} parent=0 // pred_check_branch
    %21 = sbr.rel (0) target = $region21
  $region20: #{bert_softmax_for_ner_forward.8} parent=0 // pred_region
    _
  $region21: #{bert_softmax_for_ner_forward.8} parent=0 // pred_fallthru
    _
  // Predicated region
  $region22: #{bert_softmax_for_ner_forward.8} parent=0 // pred_check
    _
  $region23: #{bert_softmax_for_ner_forward.8} parent=0 // pred_check_branch
    %23 = sbr.rel (0) target = $region25
  $region24: #{bert_softmax_for_ner_forward.8} parent=0 // pred_region
    _
  $region25: #{bert_softmax_for_ner_forward.8} parent=0 // pred_fallthru
    _
  // Predicated region
  $region26: #{bert_softmax_for_ner_forward.8} parent=0 // pred_check
    _
  $region27: #{bert_softmax_for_ner_forward.8} parent=0 // pred_check_branch
    %25 = sbr.rel (0) target = $region29
  $region28: #{bert_softmax_for_ner_forward.8} parent=0 // pred_region
    _
  $region29: #{bert_softmax_for_ner_forward.8} parent=0 // pred_fallthru
    _
  %v31 = vld [vmem:[%s0] sm:$0xf]
  %v32 = vld [vmem:[%s0 + $0x4] sm:$0xf]
  %v33 = vld [vmem:[%s1] sm:$0xf]
  %v34 = vld [vmem:[%s1 + $0x4] sm:$0xf]
  %v35 = vld [vmem:[%s1 + $0x8] sm:$0xf]
  %v36 = vld [vmem:[%s1 + $0xc] sm:$0xf]
  %v37 = vld [vmem:[%s2] sm:$0x1]
  %v39 = vlaneseq
  %v40 = vshrl.u32 %v39, 7
  %v41 = vsub.s32 0, %v40
  %v42 = vrot.slane %v37, %v41
  %v46 = vunpack.c.l.b16 %v31
  %v47 = vunpack.c.l.b16 %v32
  %v48 = vpack.c.b16 %v47, %v46
  %v53 = vunpack.c.l.b16 %v33
  %v54 = vunpack.c.l.b16 %v34
  %v55 = vunpack.c.l.b16 %v35
  %v56 = vunpack.c.l.b16 %v36
  %v57 = vpack.c.b16 %v54, %v53
  %v58 = vpack.c.b16 %v56, %v55
  %vm61 = vcmask 261120
  %v63 = vsel %vm61, %v48, 0
  %65 = vmatprep.subr.bf16.mxu0 0
  %66 = vmatpush1.bf16.msra.mxu0 %v57
  %67 = vmatprep.subr.bf16.mxu0 0
  %68 = vmatpush1.bf16.msra.mxu0 %v58
  %69 = vmatprep.subr.bf16.mxu0 0
  %70 = vmatpush1.bf16.msra.mxu0 0
  %71 = vmatprep.subr.bf16.mxu0 0
  %72 = vmatpush1.bf16.msra.mxu0 0
  %73 = vmatprep.subr.bf16.mxu0 0
  %74 = vmatpush1.bf16.msra.mxu0 0
  %75 = vmatprep.subr.bf16.mxu0 0
  %76 = vmatpush1.bf16.msra.mxu0 0
  %77 = vmatprep.subr.bf16.mxu0 0
  %78 = vmatpush1.bf16.msra.mxu0 0
  %79 = vmatprep.subr.bf16.mxu0 0
  %80 = vmatpush1.bf16.msra.mxu0 0
  %81 = vmatprep.subr.bf16.mxu0 0
  %82 = vmatpush1.bf16.msra.mxu0 0
  %83 = vmatprep.subr.bf16.mxu0 0
  %84 = vmatpush1.bf16.msra.mxu0 0
  %85 = vmatprep.subr.bf16.mxu0 0
  %86 = vmatpush1.bf16.msra.mxu0 0
  %87 = vmatprep.subr.bf16.mxu0 0
  %88 = vmatpush1.bf16.msra.mxu0 0
  %89 = vmatprep.subr.bf16.mxu0 0
  %90 = vmatpush1.bf16.msra.mxu0 0
  %91 = vmatprep.subr.bf16.mxu0 0
  %92 = vmatpush1.bf16.msra.mxu0 0
  %93 = vmatprep.subr.bf16.mxu0 0
  %94 = vmatpush1.bf16.msra.mxu0 0
  %95 = vmatprep.subr.bf16.mxu0 0
  %96 = vmatpush1.bf16.msra.mxu0 0
  %97 = vmatprep.mubr.bf16.mxu0 0
  %98 = vmatmul.mubr.bf16.gmra.mrb[0].mxu0 %v63
  %v99 = vpop.f32.mrb[0].mxu0
  %v100 = vadd.f32 %v42, %v99
  %v101 = vpop.f32.mrb[0].mxu0
  %v102 = vpop.f32.mrb[0].mxu0
  %v103 = vadd.f32 %v42, %v102
  %v104 = vpop.f32.mrb[0].mxu0
  %105 = vdwg.mxu0
  %v106 = vpack.c.bf16 %v103, %v100
  %v107 = vmul.bf16 %v106, %v106
  %v108 = vmul.bf16 %v106, %v107
  %v109 = vmul.bf16 %v108, 1027030327
  %v110 = vadd.bf16 %v106, %v109
  %v111 = vmul.bf16 %v110, 1061961548
  %v112 = vtanh.bf16.pop %v111
  %v113 = vadd.bf16 %v112, 1065369472
  %v114 = vmul.bf16 %v113, 1056980736
  %v115 = vmul.bf16 %v106, %v114
  %v116 = vld [vmem:[%s3] sm:$0xf]
  %v117 = vld [vmem:[%s3 + $0x4] sm:$0xf]
  %v118 = vld [vmem:[%s3 + $0x8] sm:$0xf]
  %v119 = vld [vmem:[%s3 + $0xc] sm:$0xf]
  %v120 = vld [vmem:[%s3 + $0x10] sm:$0xf]
  %v121 = vld [vmem:[%s3 + $0x14] sm:$0xf]
  %v122 = vld [vmem:[%s3 + $0x18] sm:$0xf]
  %v123 = vld [vmem:[%s3 + $0x1c] sm:$0xf]
  %v124 = vld [vmem:[%s4] sm:$0x1]
  %v126 = vlaneseq
  %v127 = vshrl.u32 %v126, 7
  %v128 = vsub.s32 0, %v127
  %v129 = vrot.slane %v124, %v128
  %v139 = vunpack.c.l.b16 %v116
  %v140 = vunpack.c.l.b16 %v117
  %v141 = vunpack.c.l.b16 %v118
  %v142 = vunpack.c.l.b16 %v119
  %v143 = vunpack.c.l.b16 %v120
  %v144 = vunpack.c.l.b16 %v121
  %v145 = vunpack.c.l.b16 %v122
  %v146 = vunpack.c.l.b16 %v123
  %v147 = vpack.c.b16 %v140, %v139
  %v148 = vpack.c.b16 %v142, %v141
  %v149 = vpack.c.b16 %v144, %v143
  %v150 = vpack.c.b16 %v146, %v145
  %vm155 = vcmask 523264
  %v157 = vsel %vm155, %v115, 0
  %159 = vmatprep.subr.bf16.mxu0 0
  %160 = vmatpush1.bf16.msra.mxu0 %v147
  %161 = vmatprep.subr.bf16.mxu0 0
  %162 = vmatpush1.bf16.msra.mxu0 %v148
  %163 = vmatprep.subr.bf16.mxu0 0
  %164 = vmatpush1.bf16.msra.mxu0 %v149
  %165 = vmatprep.subr.bf16.mxu0 0
  %166 = vmatpush1.bf16.msra.mxu0 %v150
  %167 = vmatprep.subr.bf16.mxu0 0
  %168 = vmatpush1.bf16.msra.mxu0 0
  %169 = vmatprep.subr.bf16.mxu0 0
  %170 = vmatpush1.bf16.msra.mxu0 0
  %171 = vmatprep.subr.bf16.mxu0 0
  %172 = vmatpush1.bf16.msra.mxu0 0
  %173 = vmatprep.subr.bf16.mxu0 0
  %174 = vmatpush1.bf16.msra.mxu0 0
  %175 = vmatprep.subr.bf16.mxu0 0
  %176 = vmatpush1.bf16.msra.mxu0 0
  %177 = vmatprep.subr.bf16.mxu0 0
  %178 = vmatpush1.bf16.msra.mxu0 0
  %179 = vmatprep.subr.bf16.mxu0 0
  %180 = vmatpush1.bf16.msra.mxu0 0
  %181 = vmatprep.subr.bf16.mxu0 0
  %182 = vmatpush1.bf16.msra.mxu0 0
  %183 = vmatprep.subr.bf16.mxu0 0
  %184 = vmatpush1.bf16.msra.mxu0 0
  %185 = vmatprep.subr.bf16.mxu0 0
  %186 = vmatpush1.bf16.msra.mxu0 0
  %187 = vmatprep.subr.bf16.mxu0 0
  %188 = vmatpush1.bf16.msra.mxu0 0
  %189 = vmatprep.subr.bf16.mxu0 0
  %190 = vmatpush1.bf16.msra.mxu0 0
  %191 = vmatprep.mubr.bf16.mxu0 0
  %192 = vmatmul.mubr.bf16.gmra.mrb[0].mxu0 %v157
  %v193 = vpop.f32.mrb[0].mxu0
  %v194 = vadd.f32 %v129, %v193
  %v195 = vpop.f32.mrb[0].mxu0
  %v196 = vpop.f32.mrb[0].mxu0
  %v197 = vadd.f32 %v129, %v196
  %v198 = vpop.f32.mrb[0].mxu0
  %199 = vdwg.mxu0
  %v200 = vunpack.c.l.bf16 %v31
  %v201 = vunpack.c.l.bf16 %v32
  %v202 = vadd.f32 %v194, %v200
  %v203 = vadd.f32 %v197, %v201
  %v204 = vsel %vm61, %v202, 0.0
  %205 = vadd.xlane.f32.xlu0 %v204
  %v206 = vpop.xlane.xlu0 %205
  %v207 = vsel %vm61, %v203, 0.0
  %208 = vadd.xlane.f32.xlu0 %v207
  %v209 = vpop.xlane.xlu0 %208
  %v210 = vrcp.pop 32.0
  %v211 = vmul.f32 %v206, %v210
  %v212 = vmul.f32 %v209, %v210
  %v213 = vsub.f32 %v202, %v211
  %v214 = vsub.f32 %v203, %v212
  %v215 = vmul.f32 %v213, %v213
  %v216 = vmul.f32 %v214, %v214
  %v217 = vsel %vm61, %v215, 0.0
  %218 = vadd.xlane.f32.xlu0 %v217
  %v219 = vpop.xlane.xlu0 %218
  %v220 = vsel %vm61, %v216, 0.0
  %221 = vadd.xlane.f32.xlu0 %v220
  %v222 = vpop.xlane.xlu0 %221
  %v223 = vmul.f32 %v219, %v210
  %v224 = vmul.f32 %v222, %v210
  %v225 = vadd.f32 %v223, 1e-12
  %v226 = vadd.f32 %v224, 1e-12
  %v227 = vrsqrt.pop %v225
  %v228 = vrsqrt.pop %v226
  %v229 = vmul.f32 %v213, %v227
  %v230 = vmul.f32 %v214, %v228
  %v231 = vld [vmem:[%s5] sm:$0x1]
  %v233 = vlaneseq
  %v234 = vshrl.u32 %v233, 7
  %v235 = vsub.s32 0, %v234
  %v236 = vrot.slane %v231, %v235
  %v238 = vmul.f32 %v229, %v236
  %v239 = vmul.f32 %v230, %v236
  %v240 = vld [vmem:[%s6] sm:$0x1]
  %v242 = vlaneseq
  %v243 = vshrl.u32 %v242, 7
  %v244 = vsub.s32 0, %v243
  %v245 = vrot.slane %v240, %v244
  %v247 = vadd.f32 %v238, %v245
  %v248 = vadd.f32 %v239, %v245
  %v249 = vpack.c.bf16 %v248, %v247
  %v251 = vunpack.c.l.b16 %v249
  %v252 = vunpack.c.h.b16 %v249
  %v253 = vpack.c.b16 %v251, %v251
  %v254 = vpack.c.b16 %v252, %v252
  %vm257 = vcmask 257024
  %258 = vst.msk [vmem:[%s7] sm:$0xf] %vm257, %v253
  %259 = vst.msk [vmem:[%s7 + $0x4] sm:$0xf] %vm257, %v254
  // Predicated region
  $region30: #{bert_softmax_for_ner_forward.8} parent=0 // pred_check
    _
  $region31: #{bert_softmax_for_ner_forward.8} parent=0 // pred_check_branch
    %261 = sbr.rel (0) target = $region33
  $region32: #{bert_softmax_for_ner_forward.8} parent=0 // pred_region
    _
  $region33: #{bert_softmax_for_ner_forward.8} parent=0 // pred_fallthru
    _
  // Predicated region
  $region34: #{bert_softmax_for_ner_forward.8} parent=0 // pred_check
    _
  $region35: #{bert_softmax_for_ner_forward.8} parent=0 // pred_check_branch
    %263 = sbr.rel (0) target = $region37
  $region36: #{bert_softmax_for_ner_forward.8} parent=0 // pred_region
    _
  $region37: #{bert_softmax_for_ner_forward.8} parent=0 // pred_fallthru
    _

// kernel: bert_softmax_for_ner_forward.7
$region0: #{bert_softmax_for_ner_forward.7}
  #allocation0 [shape = 'u32[]', space=smem, size = 0x4, offset = 0x4, fixed_abs, tag = 'smem constant byte address 0x4 - core index']
  #allocation1 [shape = 'u32[144,128]{1,0:T(1,128)}', space=vmem, size = 0x12000, scoped, tag = 'internal scratch']
  #allocation2 [shape = 'f32[8,32]{1,0:T(8,128)}', space=vmem, size = 0x1000, scoped, tag = 'scratch operand']
  %s0 = inlined_call_operand.vmem [shape: bf16[2,8,32], index: 0, kind: input, shape index: {}, may-alias: {0,1}]
  %s1 = inlined_call_operand.vmem [shape: bf16[2,8,32], index: 1, kind: input, shape index: {}, may-alias: {0,1}]
  %s2 = inlined_call_operand.vmem [shape: f32[2,1,8], index: 2, kind: input, shape index: {}]
  %s3 = inlined_call_operand.vmem [shape: bf16[32,32], index: 3, kind: input, shape index: {}]
  %s4 = inlined_call_operand.vmem [shape: bf16[32,32], index: 4, kind: input, shape index: {}]
  %s5 = inlined_call_operand.vmem [shape: bf16[32,32], index: 5, kind: input, shape index: {}]
  %s6 = inlined_call_operand.vmem [shape: f32[1,32], index: 6, kind: input, shape index: {}]
  %s7 = inlined_call_operand.vmem [shape: f32[1,32], index: 7, kind: input, shape index: {}]
  %s8 = inlined_call_operand.vmem [shape: f32[1,32], index: 8, kind: input, shape index: {}]
  %s9 = inlined_call_operand.vmem [shape: bf16[32,32], index: 9, kind: input, shape index: {}]
  %s10 = inlined_call_operand.vmem [shape: f32[1,32], index: 10, kind: input, shape index: {}]
  %s11 = inlined_call_operand.vmem [shape: f32[1,32], index: 11, kind: input, shape index: {}]
  %s12 = inlined_call_operand.vmem [shape: f32[1,32], index: 12, kind: input, shape index: {}]
  %s13 = inlined_call_operand.vmem [shape: bf16[2,8,32], index: 13, kind: output, shape index: {}]
  %s14 = sld [smem:[#allocation0]]
  $region85: #{bert_softmax_for_ner_forward.7} parent=0
    _
  %s16 = ssub.s32 1, %s14
  %s17 = scalar_select 0, %s16, %s14
  loop: start=0, step=1, limit=4
  $region2: #{bert_softmax_for_ner_forward.7} parent=0 // loop_pre_header
    _
  $region3: #{bert_softmax_for_ner_forward.7} parent=0 // loop_header
    %s19 = sphi 0, %s23
    %p20 = scmp.ge.s32.totalorder %s19, 4
    %s26 = sphi 0, %s38
    %s27 = sphi 0, %s34
    %s28 = sphi 0, %s26
    %s29 = sphi 0, %s27
    %s30 = sphi 0, %s28
    %s31 = sphi 0, %s29
    %s43 = sphi 0, %s45
    %s46 = sphi 0, %s43
    %s47 = sphi 0, %s46
    %s63 = sphi 0, %s47
    %s69 = sphi 0, %s71
    %s72 = sphi 0, %s69
    %s73 = sphi 0, %s72
    %s89 = sphi 0, %s73
    %s95 = sphi 0, %s97
    %s98 = sphi 0, %s95
    %s99 = sphi 0, %s98
    %s115 = sphi 0, %s99
    %s119 = sphi 0, %s119
    %s121 = sphi 0, %s119
    %s122 = sphi 0, %s121
    %s136 = sphi 0, %s122
    %s140 = sphi 0, %s140
    %s142 = sphi 0, %s140
    %s143 = sphi 0, %s142
    %s157 = sphi 0, %s143
    %s161 = sphi 0, %s161
    %s163 = sphi 0, %s161
    %s164 = sphi 0, %s163
    %s178 = sphi 0, %s164
    %s182 = sphi 0, %s182
    %s184 = sphi 0, %s182
    %s185 = sphi 0, %s184
    %s199 = sphi 0, %s185
    %s203 = sphi 0, %s203
    %s205 = sphi 0, %s203
    %s206 = sphi 0, %s205
    %s220 = sphi 0, %s206
    %s224 = sphi 0, %s224
    %s226 = sphi 0, %s224
    %s227 = sphi 0, %s226
    %s241 = sphi 0, %s227
    %s245 = sphi 0, %s245
    %s247 = sphi 0, %s245
    %s248 = sphi 0, %s247
    %s262 = sphi 0, %s248
    %s266 = sphi 0, %s266
    %s268 = sphi 0, %s266
    %s269 = sphi 0, %s268
    %s283 = sphi 0, %s269
    %s287 = sphi 0, %s287
    %s289 = sphi 0, %s287
    %s290 = sphi 0, %s289
    %s304 = sphi 0, %s290
    %s308 = sphi 0, %s308
    %s310 = sphi 0, %s308
    %s311 = sphi 0, %s310
    %s325 = sphi 0, %s311
    %s333 = sphi 0, %s335
    %s336 = sphi 0, %s333
    %s337 = sphi 0, %s336
    %s353 = sphi 0, %s337
  $region4: #{bert_softmax_for_ner_forward.7} parent=0 // loop_header_branch
    %22 = sbr.rel (%p20) target = $region8
  $region5: #{bert_softmax_for_ner_forward.7} parent=0 // loop_body
    %s24 = ssub.s32 %s19, 1
    %s25 = ssub.s32 %s19, 2
    %s32 = sadd.s32 1, %s27
    %p33 = scmp.ge.s32.totalorder %s32, 1
    %s34 = scalar_select %p33, 0, %s32
    %s35 = sadd.s32 1, %s26
    %s36 = scalar_select %p33, %s35, %s26
    %p37 = scmp.ge.s32.totalorder %s36, 2
    %s38 = scalar_select %p37, 0, %s36
    %s39 = ssub.s32 %s26, %s38
    %s40 = ssub.s32 %s27, %s34
    %s41 = sor.u32 %s39, %s40
    %p42 = scmp.eq.s32.totalorder %s41, 0
    %s44 = sadd.s32 %s43, 1
    %s45 = scalar_select %p42, %s43, %s44
    %p48 = pneg %p42
    %p49 = scmp.eq.s32.totalorder %s19, 1
    %p50 = por %p48, %p49
    %p51 = scmp.ne.s32.totalorder %s43, %s46
    %p52 = scmp.eq.s32.totalorder %s19, 0
    %p53 = por %p51, %p52
    %p54 = scmp.ne.s32.totalorder %s43, %s46
    %p55 = scmp.eq.s32.totalorder %s24, 1
    %p56 = por %p54, %p55
    %p57 = scmp.ne.s32.totalorder %s46, %s47
    %p58 = scmp.eq.s32.totalorder %s24, 0
    %p59 = por %p57, %p58
    %p60 = scmp.ne.s32.totalorder %s46, %s47
    %p61 = scmp.eq.s32.totalorder %s25, 1
    %p62 = por %p60, %p61
    %p64 = scmp.ne.s32.totalorder %s47, %s63
    %p65 = scmp.eq.s32.totalorder %s25, 0
    %p66 = por %p64, %p65
    %s67 = ssub.s32 %s26, %s38
    %p68 = scmp.eq.s32.totalorder %s67, 0
    %s70 = sadd.s32 %s69, 1
    %s71 = scalar_select %p68, %s69, %s70
    %p74 = pneg %p68
    %p75 = scmp.eq.s32.totalorder %s19, 1
    %p76 = por %p74, %p75
    %p77 = scmp.ne.s32.totalorder %s69, %s72
    %p78 = scmp.eq.s32.totalorder %s19, 0
    %p79 = por %p77, %p78
    %p80 = scmp.ne.s32.totalorder %s69, %s72
    %p81 = scmp.eq.s32.totalorder %s24, 1
    %p82 = por %p80, %p81
    %p83 = scmp.ne.s32.totalorder %s72, %s73
    %p84 = scmp.eq.s32.totalorder %s24, 0
    %p85 = por %p83, %p84
    %p86 = scmp.ne.s32.totalorder %s72, %s73
    %p87 = scmp.eq.s32.totalorder %s25, 1
    %p88 = por %p86, %p87
    %p90 = scmp.ne.s32.totalorder %s73, %s89
    %p91 = scmp.eq.s32.totalorder %s25, 0
    %p92 = por %p90, %p91
    %s93 = ssub.s32 %s26, %s38
    %p94 = scmp.eq.s32.totalorder %s93, 0
    %s96 = sadd.s32 %s95, 1
    %s97 = scalar_select %p94, %s95, %s96
    %p100 = pneg %p94
    %p101 = scmp.eq.s32.totalorder %s19, 1
    %p102 = por %p100, %p101
    %p103 = scmp.ne.s32.totalorder %s95, %s98
    %p104 = scmp.eq.s32.totalorder %s19, 0
    %p105 = por %p103, %p104
    %p106 = scmp.ne.s32.totalorder %s95, %s98
    %p107 = scmp.eq.s32.totalorder %s24, 1
    %p108 = por %p106, %p107
    %p109 = scmp.ne.s32.totalorder %s98, %s99
    %p110 = scmp.eq.s32.totalorder %s24, 0
    %p111 = por %p109, %p110
    %p112 = scmp.ne.s32.totalorder %s98, %s99
    %p113 = scmp.eq.s32.totalorder %s25, 1
    %p114 = por %p112, %p113
    %p116 = scmp.ne.s32.totalorder %s99, %s115
    %p117 = scmp.eq.s32.totalorder %s25, 0
    %p118 = por %p116, %p117
    %s120 = sadd.s32 %s119, 1
    %p123 = scmp.eq.s32.totalorder %s19, 1
    %p124 = scmp.ne.s32.totalorder %s119, %s121
    %p125 = scmp.eq.s32.totalorder %s19, 0
    %p126 = por %p124, %p125
    %p127 = scmp.ne.s32.totalorder %s119, %s121
    %p128 = scmp.eq.s32.totalorder %s24, 1
    %p129 = por %p127, %p128
    %p130 = scmp.ne.s32.totalorder %s121, %s122
    %p131 = scmp.eq.s32.totalorder %s24, 0
    %p132 = por %p130, %p131
    %p133 = scmp.ne.s32.totalorder %s121, %s122
    %p134 = scmp.eq.s32.totalorder %s25, 1
    %p135 = por %p133, %p134
    %p137 = scmp.ne.s32.totalorder %s122, %s136
    %p138 = scmp.eq.s32.totalorder %s25, 0
    %p139 = por %p137, %p138
    %s141 = sadd.s32 %s140, 1
    %p144 = scmp.eq.s32.totalorder %s19, 1
    %p145 = scmp.ne.s32.totalorder %s140, %s142
    %p146 = scmp.eq.s32.totalorder %s19, 0
    %p147 = por %p145, %p146
    %p148 = scmp.ne.s32.totalorder %s140, %s142
    %p149 = scmp.eq.s32.totalorder %s24, 1
    %p150 = por %p148, %p149
    %p151 = scmp.ne.s32.totalorder %s142, %s143
    %p152 = scmp.eq.s32.totalorder %s24, 0
    %p153 = por %p151, %p152
    %p154 = scmp.ne.s32.totalorder %s142, %s143
    %p155 = scmp.eq.s32.totalorder %s25, 1
    %p156 = por %p154, %p155
    %p158 = scmp.ne.s32.totalorder %s143, %s157
    %p159 = scmp.eq.s32.totalorder %s25, 0
    %p160 = por %p158, %p159
    %s162 = sadd.s32 %s161, 1
    %p165 = scmp.eq.s32.totalorder %s19, 1
    %p166 = scmp.ne.s32.totalorder %s161, %s163
    %p167 = scmp.eq.s32.totalorder %s19, 0
    %p168 = por %p166, %p167
    %p169 = scmp.ne.s32.totalorder %s161, %s163
    %p170 = scmp.eq.s32.totalorder %s24, 1
    %p171 = por %p169, %p170
    %p172 = scmp.ne.s32.totalorder %s163, %s164
    %p173 = scmp.eq.s32.totalorder %s24, 0
    %p174 = por %p172, %p173
    %p175 = scmp.ne.s32.totalorder %s163, %s164
    %p176 = scmp.eq.s32.totalorder %s25, 1
    %p177 = por %p175, %p176
    %p179 = scmp.ne.s32.totalorder %s164, %s178
    %p180 = scmp.eq.s32.totalorder %s25, 0
    %p181 = por %p179, %p180
    %s183 = sadd.s32 %s182, 1
    %p186 = scmp.eq.s32.totalorder %s19, 1
    %p187 = scmp.ne.s32.totalorder %s182, %s184
    %p188 = scmp.eq.s32.totalorder %s19, 0
    %p189 = por %p187, %p188
    %p190 = scmp.ne.s32.totalorder %s182, %s184
    %p191 = scmp.eq.s32.totalorder %s24, 1
    %p192 = por %p190, %p191
    %p193 = scmp.ne.s32.totalorder %s184, %s185
    %p194 = scmp.eq.s32.totalorder %s24, 0
    %p195 = por %p193, %p194
    %p196 = scmp.ne.s32.totalorder %s184, %s185
    %p197 = scmp.eq.s32.totalorder %s25, 1
    %p198 = por %p196, %p197
    %p200 = scmp.ne.s32.totalorder %s185, %s199
    %p201 = scmp.eq.s32.totalorder %s25, 0
    %p202 = por %p200, %p201
    %s204 = sadd.s32 %s203, 1
    %p207 = scmp.eq.s32.totalorder %s19, 1
    %p208 = scmp.ne.s32.totalorder %s203, %s205
    %p209 = scmp.eq.s32.totalorder %s19, 0
    %p210 = por %p208, %p209
    %p211 = scmp.ne.s32.totalorder %s203, %s205
    %p212 = scmp.eq.s32.totalorder %s24, 1
    %p213 = por %p211, %p212
    %p214 = scmp.ne.s32.totalorder %s205, %s206
    %p215 = scmp.eq.s32.totalorder %s24, 0
    %p216 = por %p214, %p215
    %p217 = scmp.ne.s32.totalorder %s205, %s206
    %p218 = scmp.eq.s32.totalorder %s25, 1
    %p219 = por %p217, %p218
    %p221 = scmp.ne.s32.totalorder %s206, %s220
    %p222 = scmp.eq.s32.totalorder %s25, 0
    %p223 = por %p221, %p222
    %s225 = sadd.s32 %s224, 1
    %p228 = scmp.eq.s32.totalorder %s19, 1
    %p229 = scmp.ne.s32.totalorder %s224, %s226
    %p230 = scmp.eq.s32.totalorder %s19, 0
    %p231 = por %p229, %p230
    %p232 = scmp.ne.s32.totalorder %s224, %s226
    %p233 = scmp.eq.s32.totalorder %s24, 1
    %p234 = por %p232, %p233
    %p235 = scmp.ne.s32.totalorder %s226, %s227
    %p236 = scmp.eq.s32.totalorder %s24, 0
    %p237 = por %p235, %p236
    %p238 = scmp.ne.s32.totalorder %s226, %s227
    %p239 = scmp.eq.s32.totalorder %s25, 1
    %p240 = por %p238, %p239
    %p242 = scmp.ne.s32.totalorder %s227, %s241
    %p243 = scmp.eq.s32.totalorder %s25, 0
    %p244 = por %p242, %p243
    %s246 = sadd.s32 %s245, 1
    %p249 = scmp.eq.s32.totalorder %s19, 1
    %p250 = scmp.ne.s32.totalorder %s245, %s247
    %p251 = scmp.eq.s32.totalorder %s19, 0
    %p252 = por %p250, %p251
    %p253 = scmp.ne.s32.totalorder %s245, %s247
    %p254 = scmp.eq.s32.totalorder %s24, 1
    %p255 = por %p253, %p254
    %p256 = scmp.ne.s32.totalorder %s247, %s248
    %p257 = scmp.eq.s32.totalorder %s24, 0
    %p258 = por %p256, %p257
    %p259 = scmp.ne.s32.totalorder %s247, %s248
    %p260 = scmp.eq.s32.totalorder %s25, 1
    %p261 = por %p259, %p260
    %p263 = scmp.ne.s32.totalorder %s248, %s262
    %p264 = scmp.eq.s32.totalorder %s25, 0
    %p265 = por %p263, %p264
    %s267 = sadd.s32 %s266, 1
    %p270 = scmp.eq.s32.totalorder %s19, 1
    %p271 = scmp.ne.s32.totalorder %s266, %s268
    %p272 = scmp.eq.s32.totalorder %s19, 0
    %p273 = por %p271, %p272
    %p274 = scmp.ne.s32.totalorder %s266, %s268
    %p275 = scmp.eq.s32.totalorder %s24, 1
    %p276 = por %p274, %p275
    %p277 = scmp.ne.s32.totalorder %s268, %s269
    %p278 = scmp.eq.s32.totalorder %s24, 0
    %p279 = por %p277, %p278
    %p280 = scmp.ne.s32.totalorder %s268, %s269
    %p281 = scmp.eq.s32.totalorder %s25, 1
    %p282 = por %p280, %p281
    %p284 = scmp.ne.s32.totalorder %s269, %s283
    %p285 = scmp.eq.s32.totalorder %s25, 0
    %p286 = por %p284, %p285
    %s288 = sadd.s32 %s287, 1
    %p291 = scmp.eq.s32.totalorder %s19, 1
    %p292 = scmp.ne.s32.totalorder %s287, %s289
    %p293 = scmp.eq.s32.totalorder %s19, 0
    %p294 = por %p292, %p293
    %p295 = scmp.ne.s32.totalorder %s287, %s289
    %p296 = scmp.eq.s32.totalorder %s24, 1
    %p297 = por %p295, %p296
    %p298 = scmp.ne.s32.totalorder %s289, %s290
    %p299 = scmp.eq.s32.totalorder %s24, 0
    %p300 = por %p298, %p299
    %p301 = scmp.ne.s32.totalorder %s289, %s290
    %p302 = scmp.eq.s32.totalorder %s25, 1
    %p303 = por %p301, %p302
    %p305 = scmp.ne.s32.totalorder %s290, %s304
    %p306 = scmp.eq.s32.totalorder %s25, 0
    %p307 = por %p305, %p306
    %s309 = sadd.s32 %s308, 1
    %p312 = scmp.eq.s32.totalorder %s19, 1
    %p313 = scmp.ne.s32.totalorder %s308, %s310
    %p314 = scmp.eq.s32.totalorder %s19, 0
    %p315 = por %p313, %p314
    %p316 = scmp.ne.s32.totalorder %s308, %s310
    %p317 = scmp.eq.s32.totalorder %s24, 1
    %p318 = por %p316, %p317
    %p319 = scmp.ne.s32.totalorder %s310, %s311
    %p320 = scmp.eq.s32.totalorder %s24, 0
    %p321 = por %p319, %p320
    %p322 = scmp.ne.s32.totalorder %s310, %s311
    %p323 = scmp.eq.s32.totalorder %s25, 1
    %p324 = por %p322, %p323
    %p326 = scmp.ne.s32.totalorder %s311, %s325
    %p327 = scmp.eq.s32.totalorder %s25, 0
    %p328 = por %p326, %p327
    %s329 = ssub.s32 %s26, %s38
    %s330 = ssub.s32 %s27, %s34
    %s331 = sor.u32 %s329, %s330
    %p332 = scmp.eq.s32.totalorder %s331, 0
    %s334 = sadd.s32 %s333, 1
    %s335 = scalar_select %p332, %s333, %s334
    %p338 = pneg %p332
    %p339 = scmp.eq.s32.totalorder %s19, 1
    %p340 = por %p338, %p339
    %p341 = scmp.ne.s32.totalorder %s333, %s336
    %p342 = scmp.eq.s32.totalorder %s19, 0
    %p343 = por %p341, %p342
    %p344 = scmp.ne.s32.totalorder %s333, %s336
    %p345 = scmp.eq.s32.totalorder %s24, 1
    %p346 = por %p344, %p345
    %p347 = scmp.ne.s32.totalorder %s336, %s337
    %p348 = scmp.eq.s32.totalorder %s24, 0
    %p349 = por %p347, %p348
    %p350 = scmp.ne.s32.totalorder %s336, %s337
    %p351 = scmp.eq.s32.totalorder %s25, 1
    %p352 = por %p350, %p351
    %p354 = scmp.ne.s32.totalorder %s337, %s353
    %p355 = scmp.eq.s32.totalorder %s25, 0
    %p356 = por %p354, %p355
    %p357 = scmp.le.s32.totalorder 1, %s19
    %p358 = scmp.lt.s32.totalorder %s19, 3
    %p359 = pnand %p357, %p358
    %p360 = pneg %p359
    // Predicated region
    $region9: #{bert_softmax_for_ner_forward.7} parent=5 // pred_check
      _
    $region10: #{bert_softmax_for_ner_forward.7} parent=5 // pred_check_branch
      %362 = sbr.rel (%p359) target = $region12
    $region11: #{bert_softmax_for_ner_forward.7} parent=5 // pred_region
      %s363 = ssub.s32 %s19, 1
      // Predicated region
      $region13: #{bert_softmax_for_ner_forward.7} parent=11 // pred_check
        %p364 = pneg %p132
      $region14: #{bert_softmax_for_ner_forward.7} parent=11 // pred_check_branch
        %366 = sbr.rel (%p364) target = $region16
      $region15: #{bert_softmax_for_ner_forward.7} parent=11 // pred_region
        _
      $region16: #{bert_softmax_for_ner_forward.7} parent=11 // pred_fallthru
        _
      // Predicated region
      $region17: #{bert_softmax_for_ner_forward.7} parent=11 // pred_check
        %p367 = pneg %p153
      $region18: #{bert_softmax_for_ner_forward.7} parent=11 // pred_check_branch
        %369 = sbr.rel (%p367) target = $region20
      $region19: #{bert_softmax_for_ner_forward.7} parent=11 // pred_region
        _
      $region20: #{bert_softmax_for_ner_forward.7} parent=11 // pred_fallthru
        _
      // Predicated region
      $region21: #{bert_softmax_for_ner_forward.7} parent=11 // pred_check
        %p370 = pneg %p174
      $region22: #{bert_softmax_for_ner_forward.7} parent=11 // pred_check_branch
        %372 = sbr.rel (%p370) target = $region24
      $region23: #{bert_softmax_for_ner_forward.7} parent=11 // pred_region
        _
      $region24: #{bert_softmax_for_ner_forward.7} parent=11 // pred_fallthru
        _
      // Predicated region
      $region25: #{bert_softmax_for_ner_forward.7} parent=11 // pred_check
        %p373 = pneg %p195
      $region26: #{bert_softmax_for_ner_forward.7} parent=11 // pred_check_branch
        %375 = sbr.rel (%p373) target = $region28
      $region27: #{bert_softmax_for_ner_forward.7} parent=11 // pred_region
        _
      $region28: #{bert_softmax_for_ner_forward.7} parent=11 // pred_fallthru
        _
      // Predicated region
      $region29: #{bert_softmax_for_ner_forward.7} parent=11 // pred_check
        %p376 = pneg %p216
      $region30: #{bert_softmax_for_ner_forward.7} parent=11 // pred_check_branch
        %378 = sbr.rel (%p376) target = $region32
      $region31: #{bert_softmax_for_ner_forward.7} parent=11 // pred_region
        _
      $region32: #{bert_softmax_for_ner_forward.7} parent=11 // pred_fallthru
        _
      // Predicated region
      $region33: #{bert_softmax_for_ner_forward.7} parent=11 // pred_check
        %p379 = pneg %p237
      $region34: #{bert_softmax_for_ner_forward.7} parent=11 // pred_check_branch
        %381 = sbr.rel (%p379) target = $region36
      $region35: #{bert_softmax_for_ner_forward.7} parent=11 // pred_region
        _
      $region36: #{bert_softmax_for_ner_forward.7} parent=11 // pred_fallthru
        _
      // Predicated region
      $region37: #{bert_softmax_for_ner_forward.7} parent=11 // pred_check
        %p382 = pneg %p258
      $region38: #{bert_softmax_for_ner_forward.7} parent=11 // pred_check_branch
        %384 = sbr.rel (%p382) target = $region40
      $region39: #{bert_softmax_for_ner_forward.7} parent=11 // pred_region
        _
      $region40: #{bert_softmax_for_ner_forward.7} parent=11 // pred_fallthru
        _
      // Predicated region
      $region41: #{bert_softmax_for_ner_forward.7} parent=11 // pred_check
        %p385 = pneg %p279
      $region42: #{bert_softmax_for_ner_forward.7} parent=11 // pred_check_branch
        %387 = sbr.rel (%p385) target = $region44
      $region43: #{bert_softmax_for_ner_forward.7} parent=11 // pred_region
        _
      $region44: #{bert_softmax_for_ner_forward.7} parent=11 // pred_fallthru
        _
      // Predicated region
      $region45: #{bert_softmax_for_ner_forward.7} parent=11 // pred_check
        %p388 = pneg %p300
      $region46: #{bert_softmax_for_ner_forward.7} parent=11 // pred_check_branch
        %390 = sbr.rel (%p388) target = $region48
      $region47: #{bert_softmax_for_ner_forward.7} parent=11 // pred_region
        _
      $region48: #{bert_softmax_for_ner_forward.7} parent=11 // pred_fallthru
        _
      // Predicated region
      $region49: #{bert_softmax_for_ner_forward.7} parent=11 // pred_check
        %p391 = pneg %p321
      $region50: #{bert_softmax_for_ner_forward.7} parent=11 // pred_check_branch
        %393 = sbr.rel (%p391) target = $region52
      $region51: #{bert_softmax_for_ner_forward.7} parent=11 // pred_region
        _
      $region52: #{bert_softmax_for_ner_forward.7} parent=11 // pred_fallthru
        _
    $region12: #{bert_softmax_for_ner_forward.7} parent=5 // pred_fallthru
      _
    %p394 = scmp.lt.s32.totalorder %s19, 2
    // Predicated region
    $region53: #{bert_softmax_for_ner_forward.7} parent=5 // pred_check
      %p395 = pneg %p394
    $region54: #{bert_softmax_for_ner_forward.7} parent=5 // pred_check_branch
      %397 = sbr.rel (%p395) target = $region56
    $region55: #{bert_softmax_for_ner_forward.7} parent=5 // pred_region
      // Predicated region
      $region57: #{bert_softmax_for_ner_forward.7} parent=55 // pred_check
        %p398 = pneg %p53
      $region58: #{bert_softmax_for_ner_forward.7} parent=55 // pred_check_branch
        %400 = sbr.rel (%p398) target = $region60
      $region59: #{bert_softmax_for_ner_forward.7} parent=55 // pred_region
        %p401 = scmp.lt.s32.totalorder %s26, 1
        %s402 = scalar_select %p401, %s26, 1
        %p403 = scmp.lt.s32.totalorder %s27, 0
        %s404 = scalar_select %p403, %s27, 0
        %s405 = sadd.s32 %s404, %s402
        %s406 = smul.addr %s405, 4
        %s407 = scalar_lea.vmem %s0, %s406
      $region60: #{bert_softmax_for_ner_forward.7} parent=55 // pred_fallthru
        _
      // Predicated region
      $region61: #{bert_softmax_for_ner_forward.7} parent=55 // pred_check
        %p408 = pneg %p79
      $region62: #{bert_softmax_for_ner_forward.7} parent=55 // pred_check_branch
        %410 = sbr.rel (%p408) target = $region64
      $region63: #{bert_softmax_for_ner_forward.7} parent=55 // pred_region
        %p411 = scmp.lt.s32.totalorder %s26, 1
        %s412 = scalar_select %p411, %s26, 1
        %s413 = smul.addr %s412, 4
        %s414 = scalar_lea.vmem %s1, %s413
      $region64: #{bert_softmax_for_ner_forward.7} parent=55 // pred_fallthru
        _
      // Predicated region
      $region65: #{bert_softmax_for_ner_forward.7} parent=55 // pred_check
        %p415 = pneg %p105
      $region66: #{bert_softmax_for_ner_forward.7} parent=55 // pred_check_branch
        %417 = sbr.rel (%p415) target = $region68
      $region67: #{bert_softmax_for_ner_forward.7} parent=55 // pred_region
        %p418 = scmp.lt.s32.totalorder %s26, 1
        %s419 = scalar_select %p418, %s26, 1
        %s420 = scalar_lea.vmem %s2, %s419
      $region68: #{bert_softmax_for_ner_forward.7} parent=55 // pred_fallthru
        _
    $region56: #{bert_softmax_for_ner_forward.7} parent=5 // pred_fallthru
      _
    %p421 = scmp.le.s32.totalorder 1, %s19
    %p422 = scmp.lt.s32.totalorder %s19, 3
    %p423 = pnand %p421, %p422
    %p424 = pneg %p423
    // Predicated region
    $region69: #{bert_softmax_for_ner_forward.7} parent=5 // pred_check
      _
    $region70: #{bert_softmax_for_ner_forward.7} parent=5 // pred_check_branch
      %426 = sbr.rel (%p423) target = $region72
    $region71: #{bert_softmax_for_ner_forward.7} parent=5 // pred_region
      %s427 = ssub.s32 %s19, 1
      %p428 = scmp.lt.s32.totalorder %s28, 1
      %s429 = scalar_select %p428, %s28, 1
      %p430 = scmp.lt.s32.totalorder %s29, 0
      %s431 = scalar_select %p430, %s29, 0
      %s432 = sadd.s32 %s431, %s429
      %s433 = smul.addr %s432, 4
      %s434 = scalar_lea.vmem %s0, %s433
      %p435 = pneg %p59
      %p436 = pneg %p56
      %p437 = scmp.lt.s32.totalorder %s28, 1
      %s438 = scalar_select %p437, %s28, 1
      %s439 = smul.addr %s438, 4
      %s440 = scalar_lea.vmem %s1, %s439
      %p441 = pneg %p85
      %p442 = pneg %p82
      %p443 = scmp.lt.s32.totalorder %s28, 1
      %s444 = scalar_select %p443, %s28, 1
      %s445 = scalar_lea.vmem %s2, %s444
      %p446 = pneg %p111
      %p447 = pneg %p108
      %p448 = pneg %p132
      %p449 = pneg %p129
      %p450 = pneg %p153
      %p451 = pneg %p150
      %p452 = pneg %p174
      %p453 = pneg %p171
      %p454 = pneg %p195
      %p455 = pneg %p192
      %p456 = pneg %p216
      %p457 = pneg %p213
      %p458 = pneg %p237
      %p459 = pneg %p234
      %p460 = pneg %p258
      %p461 = pneg %p255
      %p462 = pneg %p279
      %p463 = pneg %p276
      %p464 = pneg %p300
      %p465 = pneg %p297
      %p466 = pneg %p321
      %p467 = pneg %p318
      %p468 = pneg %p349
      %p469 = pneg %p346
      %p470 = scmp.lt.s32.totalorder %s28, 1
      %s471 = scalar_select %p470, %s28, 1
      %p472 = scmp.lt.s32.totalorder %s29, 0
      %s473 = scalar_select %p472, %s29, 0
      %s474 = sadd.s32 %s473, %s471
      %s475 = smul.addr %s474, 4
      %s476 = scalar_lea.vmem %s13, %s475
      %p477 = scmp.lt.s32.totalorder %s28, 1
      %s478 = scalar_select %p477, %s28, 1
      %p479 = scmp.lt.s32.totalorder %s29, 0
      %s480 = scalar_select %p479, %s29, 0
      %s481 = sadd.s32 %s480, %s478
      %s482 = smul.addr %s481, 4
      %s483 = scalar_lea.vmem %s0, %s482
      %p484 = scmp.lt.s32.totalorder %s28, 1
      %s485 = scalar_select %p484, %s28, 1
      %s486 = smul.addr %s485, 4
      %s487 = scalar_lea.vmem %s1, %s486
      %p488 = scmp.lt.s32.totalorder %s28, 1
      %s489 = scalar_select %p488, %s28, 1
      %s490 = scalar_lea.vmem %s2, %s489
      %p491 = scmp.lt.s32.totalorder %s28, 1
      %s492 = scalar_select %p491, %s28, 1
      %p493 = scmp.lt.s32.totalorder %s29, 0
      %s494 = scalar_select %p493, %s29, 0
      %s495 = sadd.s32 %s494, %s492
      %s496 = smul.addr %s495, 4
      %s497 = scalar_lea.vmem %s13, %s496
      %v499 = vld [vmem:[%s483] sm:$0xf]
      %v500 = vld [vmem:[%s487] sm:$0xf]
      %v501 = vld [vmem:[%s490] sm:$0x1]
      %v502 = vld [vmem:[%s3] sm:$0xf]
      %v503 = vld [vmem:[%s3 + $0x4] sm:$0xf]
      %v504 = vld [vmem:[%s3 + $0x8] sm:$0xf]
      %v505 = vld [vmem:[%s3 + $0xc] sm:$0xf]
      %v506 = vld [vmem:[%s6] sm:$0x1]
      %v508 = vlaneseq
      %v509 = vshrl.u32 %v508, 7
      %v510 = vsub.s32 0, %v509
      %v511 = vrot.slane %v506, %v510
      %v517 = vunpack.c.l.b16 %v502
      %v518 = vunpack.c.l.b16 %v503
      %v519 = vunpack.c.l.b16 %v504
      %v520 = vunpack.c.l.b16 %v505
      %v521 = vpack.c.b16 %v518, %v517
      %v522 = vpack.c.b16 %v520, %v519
      %vm525 = vcmask 261120
      %v527 = vsel %vm525, %v499, 0
      %529 = vmatprep.subr.bf16.mxu0 0
      %530 = vmatpush1.bf16.msra.mxu0 %v521
      %531 = vmatprep.subr.bf16.mxu0 0
      %532 = vmatpush1.bf16.msra.mxu0 %v522
      %533 = vmatprep.subr.bf16.mxu0 0
      %534 = vmatpush1.bf16.msra.mxu0 0
      %535 = vmatprep.subr.bf16.mxu0 0
      %536 = vmatpush1.bf16.msra.mxu0 0
      %537 = vmatprep.subr.bf16.mxu0 0
      %538 = vmatpush1.bf16.msra.mxu0 0
      %539 = vmatprep.subr.bf16.mxu0 0
      %540 = vmatpush1.bf16.msra.mxu0 0
      %541 = vmatprep.subr.bf16.mxu0 0
      %542 = vmatpush1.bf16.msra.mxu0 0
      %543 = vmatprep.subr.bf16.mxu0 0
      %544 = vmatpush1.bf16.msra.mxu0 0
      %545 = vmatprep.subr.bf16.mxu0 0
      %546 = vmatpush1.bf16.msra.mxu0 0
      %547 = vmatprep.subr.bf16.mxu0 0
      %548 = vmatpush1.bf16.msra.mxu0 0
      %549 = vmatprep.subr.bf16.mxu0 0
      %550 = vmatpush1.bf16.msra.mxu0 0
      %551 = vmatprep.subr.bf16.mxu0 0
      %552 = vmatpush1.bf16.msra.mxu0 0
      %553 = vmatprep.subr.bf16.mxu0 0
      %554 = vmatpush1.bf16.msra.mxu0 0
      %555 = vmatprep.subr.bf16.mxu0 0
      %556 = vmatpush1.bf16.msra.mxu0 0
      %557 = vmatprep.subr.bf16.mxu0 0
      %558 = vmatpush1.bf16.msra.mxu0 0
      %559 = vmatprep.subr.bf16.mxu0 0
      %560 = vmatpush1.bf16.msra.mxu0 0
      %561 = vmatprep.mubr.bf16.mxu0 0
      %562 = vmatmul.mubr.bf16.gmra.mrb[0].mxu0 %v527
      %v563 = vpop.f32.mrb[0].mxu0
      %v564 = vadd.f32 %v511, %v563
      %v565 = vpop.f32.mrb[0].mxu0
      %v566 = vpop.f32.mrb[0].mxu0
      %v567 = vpop.f32.mrb[0].mxu0
      %568 = vdwg.mxu0
      %v569 = vld [vmem:[%s4] sm:$0xf]
      %v570 = vld [vmem:[%s4 + $0x4] sm:$0xf]
      %v571 = vld [vmem:[%s4 + $0x8] sm:$0xf]
      %v572 = vld [vmem:[%s4 + $0xc] sm:$0xf]
      %v573 = vld [vmem:[%s7] sm:$0x1]
      %v575 = vlaneseq
      %v576 = vshrl.u32 %v575, 7
      %v577 = vsub.s32 0, %v576
      %v578 = vrot.slane %v573, %v577
      %v584 = vunpack.c.l.b16 %v569
      %v585 = vunpack.c.l.b16 %v570
      %v586 = vunpack.c.l.b16 %v571
      %v587 = vunpack.c.l.b16 %v572
      %v588 = vpack.c.b16 %v585, %v584
      %v589 = vpack.c.b16 %v587, %v586
      %v593 = vsel %vm525, %v500, 0
      %595 = vmatprep.subr.bf16.mxu0 0
      %596 = vmatpush1.bf16.msra.mxu0 %v588
      %597 = vmatprep.subr.bf16.mxu0 0
      %598 = vmatpush1.bf16.msra.mxu0 %v589
      %599 = vmatprep.subr.bf16.mxu0 0
      %600 = vmatpush1.bf16.msra.mxu0 0
      %601 = vmatprep.subr.bf16.mxu0 0
      %602 = vmatpush1.bf16.msra.mxu0 0
      %603 = vmatprep.subr.bf16.mxu0 0
      %604 = vmatpush1.bf16.msra.mxu0 0
      %605 = vmatprep.subr.bf16.mxu0 0
      %606 = vmatpush1.bf16.msra.mxu0 0
      %607 = vmatprep.subr.bf16.mxu0 0
      %608 = vmatpush1.bf16.msra.mxu0 0
      %609 = vmatprep.subr.bf16.mxu0 0
      %610 = vmatpush1.bf16.msra.mxu0 0
      %611 = vmatprep.subr.bf16.mxu0 0
      %612 = vmatpush1.bf16.msra.mxu0 0
      %613 = vmatprep.subr.bf16.mxu0 0
      %614 = vmatpush1.bf16.msra.mxu0 0
      %615 = vmatprep.subr.bf16.mxu0 0
      %616 = vmatpush1.bf16.msra.mxu0 0
      %617 = vmatprep.subr.bf16.mxu0 0
      %618 = vmatpush1.bf16.msra.mxu0 0
      %619 = vmatprep.subr.bf16.mxu0 0
      %620 = vmatpush1.bf16.msra.mxu0 0
      %621 = vmatprep.subr.bf16.mxu0 0
      %622 = vmatpush1.bf16.msra.mxu0 0
      %623 = vmatprep.subr.bf16.mxu0 0
      %624 = vmatpush1.bf16.msra.mxu0 0
      %625 = vmatprep.subr.bf16.mxu0 0
      %626 = vmatpush1.bf16.msra.mxu0 0
      %627 = vmatprep.mubr.bf16.mxu0 0
      %628 = vmatmul.mubr.bf16.gmra.mrb[0].mxu0 %v593
      %v629 = vpop.f32.mrb[0].mxu0
      %v630 = vadd.f32 %v578, %v629
      %v631 = vpop.f32.mrb[0].mxu0
      %v632 = vpop.f32.mrb[0].mxu0
      %v633 = vpop.f32.mrb[0].mxu0
      %634 = vdwg.mxu0
      %v635 = vld [vmem:[%s5] sm:$0xf]
      %v636 = vld [vmem:[%s5 + $0x4] sm:$0xf]
      %v637 = vld [vmem:[%s5 + $0x8] sm:$0xf]
      %v638 = vld [vmem:[%s5 + $0xc] sm:$0xf]
      %v639 = vld [vmem:[%s8] sm:$0x1]
      %v641 = vlaneseq
      %v642 = vshrl.u32 %v641, 7
      %v643 = vsub.s32 0, %v642
      %v644 = vrot.slane %v639, %v643
      %v650 = vunpack.c.l.b16 %v635
      %v651 = vunpack.c.l.b16 %v636
      %v652 = vunpack.c.l.b16 %v637
      %v653 = vunpack.c.l.b16 %v638
      %v654 = vpack.c.b16 %v651, %v650
      %v655 = vpack.c.b16 %v653, %v652
      %658 = vmatprep.subr.bf16.mxu0 0
      %659 = vmatpush1.bf16.msra.mxu0 %v654
      %660 = vmatprep.subr.bf16.mxu0 0
      %661 = vmatpush1.bf16.msra.mxu0 %v655
      %662 = vmatprep.subr.bf16.mxu0 0
      %663 = vmatpush1.bf16.msra.mxu0 0
      %664 = vmatprep.subr.bf16.mxu0 0
      %665 = vmatpush1.bf16.msra.mxu0 0
      %666 = vmatprep.subr.bf16.mxu0 0
      %667 = vmatpush1.bf16.msra.mxu0 0
      %668 = vmatprep.subr.bf16.mxu0 0
      %669 = vmatpush1.bf16.msra.mxu0 0
      %670 = vmatprep.subr.bf16.mxu0 0
      %671 = vmatpush1.bf16.msra.mxu0 0
      %672 = vmatprep.subr.bf16.mxu0 0
      %673 = vmatpush1.bf16.msra.mxu0 0
      %674 = vmatprep.subr.bf16.mxu0 0
      %675 = vmatpush1.bf16.msra.mxu0 0
      %676 = vmatprep.subr.bf16.mxu0 0
      %677 = vmatpush1.bf16.msra.mxu0 0
      %678 = vmatprep.subr.bf16.mxu0 0
      %679 = vmatpush1.bf16.msra.mxu0 0
      %680 = vmatprep.subr.bf16.mxu0 0
      %681 = vmatpush1.bf16.msra.mxu0 0
      %682 = vmatprep.subr.bf16.mxu0 0
      %683 = vmatpush1.bf16.msra.mxu0 0
      %684 = vmatprep.subr.bf16.mxu0 0
      %685 = vmatpush1.bf16.msra.mxu0 0
      %686 = vmatprep.subr.bf16.mxu0 0
      %687 = vmatpush1.bf16.msra.mxu0 0
      %688 = vmatprep.subr.bf16.mxu0 0
      %689 = vmatpush1.bf16.msra.mxu0 0
      %690 = vmatprep.mubr.bf16.mxu0 0
      %691 = vmatmul.mubr.bf16.gmra.mrb[0].mxu0 %v593
      %v692 = vpop.f32.mrb[0].mxu0
      %v693 = vadd.f32 %v644, %v692
      %v694 = vpop.f32.mrb[0].mxu0
      %v695 = vpop.f32.mrb[0].mxu0
      %v696 = vpop.f32.mrb[0].mxu0
      %697 = vdwg.mxu0
      %v698 = vpack.c.bf16 %v564, %v564
      %v699 = vpack.c.bf16 %v630, %v630
      %v700 = vpack.c.bf16 %v693, %v693
      %vm701 = vcmask 64512
      %v703 = vsel %vm701, %v698, 0
      %v706 = vsel %vm701, %v699, 0
      %708 = vmatprep.subr.bf16.mxu0 0
      %709 = vmatpush1.bf16.xpose.msra.mxu0 %v706
      %710 = vmatprep.subr.bf16.mxu0 0
      %711 = vmatpush1.bf16.xpose.msra.mxu0 0
      %712 = vmatprep.subr.bf16.mxu0 0
      %713 = vmatpush1.bf16.xpose.msra.mxu0 0
      %714 = vmatprep.subr.bf16.mxu0 0
      %715 = vmatpush1.bf16.xpose.msra.mxu0 0
      %716 = vmatprep.subr.bf16.mxu0 0
      %717 = vmatpush1.bf16.xpose.msra.mxu0 0
      %718 = vmatprep.subr.bf16.mxu0 0
      %719 = vmatpush1.bf16.xpose.msra.mxu0 0
      %720 = vmatprep.subr.bf16.mxu0 0
      %721 = vmatpush1.bf16.xpose.msra.mxu0 0
      %722 = vmatprep.subr.bf16.mxu0 0
      %723 = vmatpush1.bf16.xpose.msra.mxu0 0
      %724 = vmatprep.subr.bf16.mxu0 0
      %725 = vmatpush1.bf16.xpose.msra.mxu0 0
      %726 = vmatprep.subr.bf16.mxu0 0
      %727 = vmatpush1.bf16.xpose.msra.mxu0 0
      %728 = vmatprep.subr.bf16.mxu0 0
      %729 = vmatpush1.bf16.xpose.msra.mxu0 0
      %730 = vmatprep.subr.bf16.mxu0 0
      %731 = vmatpush1.bf16.xpose.msra.mxu0 0
      %732 = vmatprep.subr.bf16.mxu0 0
      %733 = vmatpush1.bf16.xpose.msra.mxu0 0
      %734 = vmatprep.subr.bf16.mxu0 0
      %735 = vmatpush1.bf16.xpose.msra.mxu0 0
      %736 = vmatprep.subr.bf16.mxu0 0
      %737 = vmatpush1.bf16.xpose.msra.mxu0 0
      %738 = vmatprep.subr.bf16.mxu0 0
      %739 = vmatpush1.bf16.xpose.msra.mxu0 0
      %740 = vmatprep.mubr.bf16.mxu0 0
      %741 = vmatmul.mubr.bf16.gmra.mrb[0].mxu0 %v703
      %v742 = vpop.f32.mrb[0].mxu0
      %v743 = vadd.f32 0.0, %v742
      %v744 = vpop.f32.mrb[0].mxu0
      %v745 = vpop.f32.mrb[0].mxu0
      %v746 = vpop.f32.mrb[0].mxu0
      %747 = vdwg.mxu0
      %v748 = vmul.f32 %v743, 0.35355338
      %v750 = vlaneseq
      %v751 = vshrl.u32 %v750, 7
      %v752 = vsub.s32 0, %v751
      %v753 = vrot.slane %v501, %v752
      %v755 = vadd.f32 %v748, %v753
      %v756 = vsel %vm701, %v755, -inf
      %757 = vmax.xlane.f32.xlu0 %v756
      %v758 = vpop.xlane.xlu0 %757
      %v759 = vsub.f32 %v755, %v758
      %v760 = vpack.c.bf16 %v759, %v759
      %v762 = vmul.bf16 %v760, 1069105081
      %v763 = vpow.bf16.pop %v762
      %v764 = vunpack.c.l.bf16 %v763
      %v765 = vsel %vm701, %v764, 0.0
      %766 = vadd.xlane.f32.xlu0 %v765
      %v767 = vpop.xlane.xlu0 %766
      %v769 = vsel %vm701, %v763, 0
      %vm771 = vcmask 1043456
      %v773 = vsel %vm771, %v700, 0
      %775 = vmatprep.subr.bf16.mxu0 0
      %776 = vmatpush1.bf16.msra.mxu0 %v773
      %777 = vmatprep.subr.bf16.mxu0 0
      %778 = vmatpush1.bf16.msra.mxu0 0
      %779 = vmatprep.subr.bf16.mxu0 0
      %780 = vmatpush1.bf16.msra.mxu0 0
      %781 = vmatprep.subr.bf16.mxu0 0
      %782 = vmatpush1.bf16.msra.mxu0 0
      %783 = vmatprep.subr.bf16.mxu0 0
      %784 = vmatpush1.bf16.msra.mxu0 0
      %785 = vmatprep.subr.bf16.mxu0 0
      %786 = vmatpush1.bf16.msra.mxu0 0
      %787 = vmatprep.subr.bf16.mxu0 0
      %788 = vmatpush1.bf16.msra.mxu0 0
      %789 = vmatprep.subr.bf16.mxu0 0
      %790 = vmatpush1.bf16.msra.mxu0 0
      %791 = vmatprep.subr.bf16.mxu0 0
      %792 = vmatpush1.bf16.msra.mxu0 0
      %793 = vmatprep.subr.bf16.mxu0 0
      %794 = vmatpush1.bf16.msra.mxu0 0
      %795 = vmatprep.subr.bf16.mxu0 0
      %796 = vmatpush1.bf16.msra.mxu0 0
      %797 = vmatprep.subr.bf16.mxu0 0
      %798 = vmatpush1.bf16.msra.mxu0 0
      %799 = vmatprep.subr.bf16.mxu0 0
      %800 = vmatpush1.bf16.msra.mxu0 0
      %801 = vmatprep.subr.bf16.mxu0 0
      %802 = vmatpush1.bf16.msra.mxu0 0
      %803 = vmatprep.subr.bf16.mxu0 0
      %804 = vmatpush1.bf16.msra.mxu0 0
      %805 = vmatprep.subr.bf16.mxu0 0
      %806 = vmatpush1.bf16.msra.mxu0 0
      %807 = vmatprep.mubr.bf16.mxu0 0
      %808 = vmatmul.mubr.bf16.gmra.mrb[0].mxu0 %v769
      %v809 = vpop.f32.mrb[0].mxu0
      %v810 = vadd.f32 0.0, %v809
      %v811 = vpop.f32.mrb[0].mxu0
      %v812 = vpop.f32.mrb[0].mxu0
      %v813 = vpop.f32.mrb[0].mxu0
      %814 = vdwg.mxu0
      %v815 = vrcp.pop %v767
      %v816 = vmul.f32 %v810, %v815
      %817 = vst.msk [vmem:[#allocation2] sm:$0xff] %vm701, %v816
      %819 = vrot.lane.b32.xlu0 %v698, 120
      %v820 = vpop.permute.xlu0 %819
      %822 = vrot.lane.b32.xlu0 %v699, 120
      %v823 = vpop.permute.xlu0 %822
      %v825 = vsel %vm701, %v820, 0
      %v828 = vsel %vm701, %v823, 0
      %830 = vmatprep.subr.bf16.mxu0 0
      %831 = vmatpush1.bf16.xpose.msra.mxu0 %v828
      %832 = vmatprep.subr.bf16.mxu0 0
      %833 = vmatpush1.bf16.xpose.msra.mxu0 0
      %834 = vmatprep.subr.bf16.mxu0 0
      %835 = vmatpush1.bf16.xpose.msra.mxu0 0
      %836 = vmatprep.subr.bf16.mxu0 0
      %837 = vmatpush1.bf16.xpose.msra.mxu0 0
      %838 = vmatprep.subr.bf16.mxu0 0
      %839 = vmatpush1.bf16.xpose.msra.mxu0 0
      %840 = vmatprep.subr.bf16.mxu0 0
      %841 = vmatpush1.bf16.xpose.msra.mxu0 0
      %842 = vmatprep.subr.bf16.mxu0 0
      %843 = vmatpush1.bf16.xpose.msra.mxu0 0
      %844 = vmatprep.subr.bf16.mxu0 0
      %845 = vmatpush1.bf16.xpose.msra.mxu0 0
      %846 = vmatprep.subr.bf16.mxu0 0
      %847 = vmatpush1.bf16.xpose.msra.mxu0 0
      %848 = vmatprep.subr.bf16.mxu0 0
      %849 = vmatpush1.bf16.xpose.msra.mxu0 0
      %850 = vmatprep.subr.bf16.mxu0 0
      %851 = vmatpush1.bf16.xpose.msra.mxu0 0
      %852 = vmatprep.subr.bf16.mxu0 0
      %853 = vmatpush1.bf16.xpose.msra.mxu0 0
      %854 = vmatprep.subr.bf16.mxu0 0
      %855 = vmatpush1.bf16.xpose.msra.mxu0 0
      %856 = vmatprep.subr.bf16.mxu0 0
      %857 = vmatpush1.bf16.xpose.msra.mxu0 0
      %858 = vmatprep.subr.bf16.mxu0 0
      %859 = vmatpush1.bf16.xpose.msra.mxu0 0
      %860 = vmatprep.subr.bf16.mxu0 0
      %861 = vmatpush1.bf16.xpose.msra.mxu0 0
      %862 = vmatprep.mubr.bf16.mxu0 0
      %863 = vmatmul.mubr.bf16.gmra.mrb[0].mxu0 %v825
      %v864 = vpop.f32.mrb[0].mxu0
      %v865 = vadd.f32 0.0, %v864
      %v866 = vpop.f32.mrb[0].mxu0
      %v867 = vpop.f32.mrb[0].mxu0
      %v868 = vpop.f32.mrb[0].mxu0
      %869 = vdwg.mxu0
      %v870 = vmul.f32 %v865, 0.35355338
      %v871 = vadd.f32 %v870, %v753
      %v872 = vsel %vm701, %v871, -inf
      %873 = vmax.xlane.f32.xlu0 %v872
      %v874 = vpop.xlane.xlu0 %873
      %v875 = vsub.f32 %v871, %v874
      %v876 = vpack.c.bf16 %v875, %v875
      %v878 = vmul.bf16 %v876, 1069105081
      %v879 = vpow.bf16.pop %v878
      %v880 = vunpack.c.l.bf16 %v879
      %v881 = vsel %vm701, %v880, 0.0
      %882 = vadd.xlane.f32.xlu0 %v881
      %v883 = vpop.xlane.xlu0 %882
      %885 = vrot.lane.b32.xlu0 %v700, 120
      %v886 = vpop.permute.xlu0 %885
      %v888 = vsel %vm701, %v879, 0
      %v891 = vsel %vm771, %v886, 0
      %893 = vmatprep.subr.bf16.mxu0 0
      %894 = vmatpush1.bf16.msra.mxu0 %v891
      %895 = vmatprep.subr.bf16.mxu0 0
      %896 = vmatpush1.bf16.msra.mxu0 0
      %897 = vmatprep.subr.bf16.mxu0 0
      %898 = vmatpush1.bf16.msra.mxu0 0
      %899 = vmatprep.subr.bf16.mxu0 0
      %900 = vmatpush1.bf16.msra.mxu0 0
      %901 = vmatprep.subr.bf16.mxu0 0
      %902 = vmatpush1.bf16.msra.mxu0 0
      %903 = vmatprep.subr.bf16.mxu0 0
      %904 = vmatpush1.bf16.msra.mxu0 0
      %905 = vmatprep.subr.bf16.mxu0 0
      %906 = vmatpush1.bf16.msra.mxu0 0
      %907 = vmatprep.subr.bf16.mxu0 0
      %908 = vmatpush1.bf16.msra.mxu0 0
      %909 = vmatprep.subr.bf16.mxu0 0
      %910 = vmatpush1.bf16.msra.mxu0 0
      %911 = vmatprep.subr.bf16.mxu0 0
      %912 = vmatpush1.bf16.msra.mxu0 0
      %913 = vmatprep.subr.bf16.mxu0 0
      %914 = vmatpush1.bf16.msra.mxu0 0
      %915 = vmatprep.subr.bf16.mxu0 0
      %916 = vmatpush1.bf16.msra.mxu0 0
      %917 = vmatprep.subr.bf16.mxu0 0
      %918 = vmatpush1.bf16.msra.mxu0 0
      %919 = vmatprep.subr.bf16.mxu0 0
      %920 = vmatpush1.bf16.msra.mxu0 0
      %921 = vmatprep.subr.bf16.mxu0 0
      %922 = vmatpush1.bf16.msra.mxu0 0
      %923 = vmatprep.subr.bf16.mxu0 0
      %924 = vmatpush1.bf16.msra.mxu0 0
      %925 = vmatprep.mubr.bf16.mxu0 0
      %926 = vmatmul.mubr.bf16.gmra.mrb[0].mxu0 %v888
      %v927 = vpop.f32.mrb[0].mxu0
      %v928 = vadd.f32 0.0, %v927
      %v929 = vpop.f32.mrb[0].mxu0
      %v930 = vpop.f32.mrb[0].mxu0
      %v931 = vpop.f32.mrb[0].mxu0
      %932 = vdwg.mxu0
      %v933 = vrcp.pop %v883
      %v934 = vmul.f32 %v928, %v933
      %936 = vrot.lane.b32.xlu0 %v934, 8
      %v937 = vpop.permute.xlu0 %936
      %vm939 = vcmask 130112
      %940 = vst.msk [vmem:[#allocation2] sm:$0xff] %vm939, %v937
      %941 = vrot.lane.b32.xlu0 %v698, 112
      %v942 = vpop.permute.xlu0 %941
      %943 = vrot.lane.b32.xlu0 %v699, 112
      %v944 = vpop.permute.xlu0 %943
      %v946 = vsel %vm701, %v942, 0
      %v949 = vsel %vm701, %v944, 0
      %951 = vmatprep.subr.bf16.mxu0 0
      %952 = vmatpush1.bf16.xpose.msra.mxu0 %v949
      %953 = vmatprep.subr.bf16.mxu0 0
      %954 = vmatpush1.bf16.xpose.msra.mxu0 0
      %955 = vmatprep.subr.bf16.mxu0 0
      %956 = vmatpush1.bf16.xpose.msra.mxu0 0
      %957 = vmatprep.subr.bf16.mxu0 0
      %958 = vmatpush1.bf16.xpose.msra.mxu0 0
      %959 = vmatprep.subr.bf16.mxu0 0
      %960 = vmatpush1.bf16.xpose.msra.mxu0 0
      %961 = vmatprep.subr.bf16.mxu0 0
      %962 = vmatpush1.bf16.xpose.msra.mxu0 0
      %963 = vmatprep.subr.bf16.mxu0 0
      %964 = vmatpush1.bf16.xpose.msra.mxu0 0
      %965 = vmatprep.subr.bf16.mxu0 0
      %966 = vmatpush1.bf16.xpose.msra.mxu0 0
      %967 = vmatprep.subr.bf16.mxu0 0
      %968 = vmatpush1.bf16.xpose.msra.mxu0 0
      %969 = vmatprep.subr.bf16.mxu0 0
      %970 = vmatpush1.bf16.xpose.msra.mxu0 0
      %971 = vmatprep.subr.bf16.mxu0 0
      %972 = vmatpush1.bf16.xpose.msra.mxu0 0
      %973 = vmatprep.subr.bf16.mxu0 0
      %974 = vmatpush1.bf16.xpose.msra.mxu0 0
      %975 = vmatprep.subr.bf16.mxu0 0
      %976 = vmatpush1.bf16.xpose.msra.mxu0 0
      %977 = vmatprep.subr.bf16.mxu0 0
      %978 = vmatpush1.bf16.xpose.msra.mxu0 0
      %979 = vmatprep.subr.bf16.mxu0 0
      %980 = vmatpush1.bf16.xpose.msra.mxu0 0
      %981 = vmatprep.subr.bf16.mxu0 0
      %982 = vmatpush1.bf16.xpose.msra.mxu0 0
      %983 = vmatprep.mubr.bf16.mxu0 0
      %984 = vmatmul.mubr.bf16.gmra.mrb[0].mxu0 %v946
      %v985 = vpop.f32.mrb[0].mxu0
      %v986 = vadd.f32 0.0, %v985
      %v987 = vpop.f32.mrb[0].mxu0
      %v988 = vpop.f32.mrb[0].mxu0
      %v989 = vpop.f32.mrb[0].mxu0
      %990 = vdwg.mxu0
      %v991 = vmul.f32 %v986, 0.35355338
      %v992 = vadd.f32 %v991, %v753
      %v993 = vsel %vm701, %v992, -inf
      %994 = vmax.xlane.f32.xlu0 %v993
      %v995 = vpop.xlane.xlu0 %994
      %v996 = vsub.f32 %v992, %v995
      %v997 = vpack.c.bf16 %v996, %v996
      %v999 = vmul.bf16 %v997, 1069105081
      %v1000 = vpow.bf16.pop %v999
      %v1001 = vunpack.c.l.bf16 %v1000
      %v1002 = vsel %vm701, %v1001, 0.0
      %1003 = vadd.xlane.f32.xlu0 %v1002
      %v1004 = vpop.xlane.xlu0 %1003
      %1005 = vrot.lane.b32.xlu0 %v700, 112
      %v1006 = vpop.permute.xlu0 %1005
      %v1008 = vsel %vm701, %v1000, 0
      %v1011 = vsel %vm771, %v1006, 0
      %1013 = vmatprep.subr.bf16.mxu0 0
      %1014 = vmatpush1.bf16.msra.mxu0 %v1011
      %1015 = vmatprep.subr.bf16.mxu0 0
      %1016 = vmatpush1.bf16.msra.mxu0 0
      %1017 = vmatprep.subr.bf16.mxu0 0
      %1018 = vmatpush1.bf16.msra.mxu0 0
      %1019 = vmatprep.subr.bf16.mxu0 0
      %1020 = vmatpush1.bf16.msra.mxu0 0
      %1021 = vmatprep.subr.bf16.mxu0 0
      %1022 = vmatpush1.bf16.msra.mxu0 0
      %1023 = vmatprep.subr.bf16.mxu0 0
      %1024 = vmatpush1.bf16.msra.mxu0 0
      %1025 = vmatprep.subr.bf16.mxu0 0
      %1026 = vmatpush1.bf16.msra.mxu0 0
      %1027 = vmatprep.subr.bf16.mxu0 0
      %1028 = vmatpush1.bf16.msra.mxu0 0
      %1029 = vmatprep.subr.bf16.mxu0 0
      %1030 = vmatpush1.bf16.msra.mxu0 0
      %1031 = vmatprep.subr.bf16.mxu0 0
      %1032 = vmatpush1.bf16.msra.mxu0 0
      %1033 = vmatprep.subr.bf16.mxu0 0
      %1034 = vmatpush1.bf16.msra.mxu0 0
      %1035 = vmatprep.subr.bf16.mxu0 0
      %1036 = vmatpush1.bf16.msra.mxu0 0
      %1037 = vmatprep.subr.bf16.mxu0 0
      %1038 = vmatpush1.bf16.msra.mxu0 0
      %1039 = vmatprep.subr.bf16.mxu0 0
      %1040 = vmatpush1.bf16.msra.mxu0 0
      %1041 = vmatprep.subr.bf16.mxu0 0
      %1042 = vmatpush1.bf16.msra.mxu0 0
      %1043 = vmatprep.subr.bf16.mxu0 0
      %1044 = vmatpush1.bf16.msra.mxu0 0
      %1045 = vmatprep.mubr.bf16.mxu0 0
      %1046 = vmatmul.mubr.bf16.gmra.mrb[0].mxu0 %v1008
      %v1047 = vpop.f32.mrb[0].mxu0
      %v1048 = vadd.f32 0.0, %v1047
      %v1049 = vpop.f32.mrb[0].mxu0
      %v1050 = vpop.f32.mrb[0].mxu0
      %v1051 = vpop.f32.mrb[0].mxu0
      %1052 = vdwg.mxu0
      %v1053 = vrcp.pop %v1004
      %v1054 = vmul.f32 %v1048, %v1053
      %1056 = vrot.lane.b32.xlu0 %v1054, 16
      %v1057 = vpop.permute.xlu0 %1056
      %vm1059 = vcmask 195712
      %1060 = vst.msk [vmem:[#allocation2] sm:$0xff] %vm1059, %v1057
      %1061 = vrot.lane.b32.xlu0 %v698, 104
      %v1062 = vpop.permute.xlu0 %1061
      %1063 = vrot.lane.b32.xlu0 %v699, 104
      %v1064 = vpop.permute.xlu0 %1063
      %v1066 = vsel %vm701, %v1062, 0
      %v1069 = vsel %vm701, %v1064, 0
      %1071 = vmatprep.subr.bf16.mxu0 0
      %1072 = vmatpush1.bf16.xpose.msra.mxu0 %v1069
      %1073 = vmatprep.subr.bf16.mxu0 0
      %1074 = vmatpush1.bf16.xpose.msra.mxu0 0
      %1075 = vmatprep.subr.bf16.mxu0 0
      %1076 = vmatpush1.bf16.xpose.msra.mxu0 0
      %1077 = vmatprep.subr.bf16.mxu0 0
      %1078 = vmatpush1.bf16.xpose.msra.mxu0 0
      %1079 = vmatprep.subr.bf16.mxu0 0
      %1080 = vmatpush1.bf16.xpose.msra.mxu0 0
      %1081 = vmatprep.subr.bf16.mxu0 0
      %1082 = vmatpush1.bf16.xpose.msra.mxu0 0
      %1083 = vmatprep.subr.bf16.mxu0 0
      %1084 = vmatpush1.bf16.xpose.msra.mxu0 0
      %1085 = vmatprep.subr.bf16.mxu0 0
      %1086 = vmatpush1.bf16.xpose.msra.mxu0 0
      %1087 = vmatprep.subr.bf16.mxu0 0
      %1088 = vmatpush1.bf16.xpose.msra.mxu0 0
      %1089 = vmatprep.subr.bf16.mxu0 0
      %1090 = vmatpush1.bf16.xpose.msra.mxu0 0
      %1091 = vmatprep.subr.bf16.mxu0 0
      %1092 = vmatpush1.bf16.xpose.msra.mxu0 0
      %1093 = vmatprep.subr.bf16.mxu0 0
      %1094 = vmatpush1.bf16.xpose.msra.mxu0 0
      %1095 = vmatprep.subr.bf16.mxu0 0
      %1096 = vmatpush1.bf16.xpose.msra.mxu0 0
      %1097 = vmatprep.subr.bf16.mxu0 0
      %1098 = vmatpush1.bf16.xpose.msra.mxu0 0
      %1099 = vmatprep.subr.bf16.mxu0 0
      %1100 = vmatpush1.bf16.xpose.msra.mxu0 0
      %1101 = vmatprep.subr.bf16.mxu0 0
      %1102 = vmatpush1.bf16.xpose.msra.mxu0 0
      %1103 = vmatprep.mubr.bf16.mxu0 0
      %1104 = vmatmul.mubr.bf16.gmra.mrb[0].mxu0 %v1066
      %v1105 = vpop.f32.mrb[0].mxu0
      %v1106 = vadd.f32 0.0, %v1105
      %v1107 = vpop.f32.mrb[0].mxu0
      %v1108 = vpop.f32.mrb[0].mxu0
      %v1109 = vpop.f32.mrb[0].mxu0
      %1110 = vdwg.mxu0
      %v1111 = vmul.f32 %v1106, 0.35355338
      %v1112 = vadd.f32 %v1111, %v753
      %v1113 = vsel %vm701, %v1112, -inf
      %1114 = vmax.xlane.f32.xlu0 %v1113
      %v1115 = vpop.xlane.xlu0 %1114
      %v1116 = vsub.f32 %v1112, %v1115
      %v1117 = vpack.c.bf16 %v1116, %v1116
      %v1119 = vmul.bf16 %v1117, 1069105081
      %v1120 = vpow.bf16.pop %v1119
      %v1121 = vunpack.c.l.bf16 %v1120
      %v1122 = vsel %vm701, %v1121, 0.0
      %1123 = vadd.xlane.f32.xlu0 %v1122
      %v1124 = vpop.xlane.xlu0 %1123
      %1125 = vrot.lane.b32.xlu0 %v700, 104
      %v1126 = vpop.permute.xlu0 %1125
      %v1128 = vsel %vm701, %v1120, 0
      %v1131 = vsel %vm771, %v1126, 0
      %1133 = vmatprep.subr.bf16.mxu0 0
      %1134 = vmatpush1.bf16.msra.mxu0 %v1131
      %1135 = vmatprep.subr.bf16.mxu0 0
      %1136 = vmatpush1.bf16.msra.mxu0 0
      %1137 = vmatprep.subr.bf16.mxu0 0
      %1138 = vmatpush1.bf16.msra.mxu0 0
      %1139 = vmatprep.subr.bf16.mxu0 0
      %1140 = vmatpush1.bf16.msra.mxu0 0
      %1141 = vmatprep.subr.bf16.mxu0 0
      %1142 = vmatpush1.bf16.msra.mxu0 0
      %1143 = vmatprep.subr.bf16.mxu0 0
      %1144 = vmatpush1.bf16.msra.mxu0 0
      %1145 = vmatprep.subr.bf16.mxu0 0
      %1146 = vmatpush1.bf16.msra.mxu0 0
      %1147 = vmatprep.subr.bf16.mxu0 0
      %1148 = vmatpush1.bf16.msra.mxu0 0
      %1149 = vmatprep.subr.bf16.mxu0 0
      %1150 = vmatpush1.bf16.msra.mxu0 0
      %1151 = vmatprep.subr.bf16.mxu0 0
      %1152 = vmatpush1.bf16.msra.mxu0 0
      %1153 = vmatprep.subr.bf16.mxu0 0
      %1154 = vmatpush1.bf16.msra.mxu0 0
      %1155 = vmatprep.subr.bf16.mxu0 0
      %1156 = vmatpush1.bf16.msra.mxu0 0
      %1157 = vmatprep.subr.bf16.mxu0 0
      %1158 = vmatpush1.bf16.msra.mxu0 0
      %1159 = vmatprep.subr.bf16.mxu0 0
      %1160 = vmatpush1.bf16.msra.mxu0 0
      %1161 = vmatprep.subr.bf16.mxu0 0
      %1162 = vmatpush1.bf16.msra.mxu0 0
      %1163 = vmatprep.subr.bf16.mxu0 0
      %1164 = vmatpush1.bf16.msra.mxu0 0
      %1165 = vmatprep.mubr.bf16.mxu0 0
      %1166 = vmatmul.mubr.bf16.gmra.mrb[0].mxu0 %v1128
      %v1167 = vpop.f32.mrb[0].mxu0
      %v1168 = vadd.f32 0.0, %v1167
      %v1169 = vpop.f32.mrb[0].mxu0
      %v1170 = vpop.f32.mrb[0].mxu0
      %v1171 = vpop.f32.mrb[0].mxu0
      %1172 = vdwg.mxu0
      %v1173 = vrcp.pop %v1124
      %v1174 = vmul.f32 %v1168, %v1173
      %1176 = vrot.lane.b32.xlu0 %v1174, 24
      %v1177 = vpop.permute.xlu0 %1176
      %vm1179 = vcmask 261312
      %1180 = vst.msk [vmem:[#allocation2] sm:$0xff] %vm1179, %v1177
      %v1181 = vld [vmem:[#allocation2] sm:$0xff]
      %v1182 = vpack.c.bf16 %v1181, %v1181
      %v1183 = vld [vmem:[%s9] sm:$0xf]
      %v1184 = vld [vmem:[%s9 + $0x4] sm:$0xf]
      %v1185 = vld [vmem:[%s9 + $0x8] sm:$0xf]
      %v1186 = vld [vmem:[%s9 + $0xc] sm:$0xf]
      %v1187 = vld [vmem:[%s10] sm:$0x1]
      %v1189 = vlaneseq
      %v1190 = vshrl.u32 %v1189, 7
      %v1191 = vsub.s32 0, %v1190
      %v1192 = vrot.slane %v1187, %v1191
      %v1198 = vunpack.c.l.b16 %v1183
      %v1199 = vunpack.c.l.b16 %v1184
      %v1200 = vunpack.c.l.b16 %v1185
      %v1201 = vunpack.c.l.b16 %v1186
      %v1202 = vpack.c.b16 %v1199, %v1198
      %v1203 = vpack.c.b16 %v1201, %v1200
      %v1207 = vsel %vm525, %v1182, 0
      %1209 = vmatprep.subr.bf16.mxu0 0
      %1210 = vmatpush1.bf16.msra.mxu0 %v1202
      %1211 = vmatprep.subr.bf16.mxu0 0
      %1212 = vmatpush1.bf16.msra.mxu0 %v1203
      %1213 = vmatprep.subr.bf16.mxu0 0
      %1214 = vmatpush1.bf16.msra.mxu0 0
      %1215 = vmatprep.subr.bf16.mxu0 0
      %1216 = vmatpush1.bf16.msra.mxu0 0
      %1217 = vmatprep.subr.bf16.mxu0 0
      %1218 = vmatpush1.bf16.msra.mxu0 0
      %1219 = vmatprep.subr.bf16.mxu0 0
      %1220 = vmatpush1.bf16.msra.mxu0 0
      %1221 = vmatprep.subr.bf16.mxu0 0
      %1222 = vmatpush1.bf16.msra.mxu0 0
      %1223 = vmatprep.subr.bf16.mxu0 0
      %1224 = vmatpush1.bf16.msra.mxu0 0
      %1225 = vmatprep.subr.bf16.mxu0 0
      %1226 = vmatpush1.bf16.msra.mxu0 0
      %1227 = vmatprep.subr.bf16.mxu0 0
      %1228 = vmatpush1.bf16.msra.mxu0 0
      %1229 = vmatprep.subr.bf16.mxu0 0
      %1230 = vmatpush1.bf16.msra.mxu0 0
      %1231 = vmatprep.subr.bf16.mxu0 0
      %1232 = vmatpush1.bf16.msra.mxu0 0
      %1233 = vmatprep.subr.bf16.mxu0 0
      %1234 = vmatpush1.bf16.msra.mxu0 0
      %1235 = vmatprep.subr.bf16.mxu0 0
      %1236 = vmatpush1.bf16.msra.mxu0 0
      %1237 = vmatprep.subr.bf16.mxu0 0
      %1238 = vmatpush1.bf16.msra.mxu0 0
      %1239 = vmatprep.subr.bf16.mxu0 0
      %1240 = vmatpush1.bf16.msra.mxu0 0
      %1241 = vmatprep.mubr.bf16.mxu0 0
      %1242 = vmatmul.mubr.bf16.gmra.mrb[0].mxu0 %v1207
      %v1243 = vpop.f32.mrb[0].mxu0
      %v1244 = vadd.f32 %v1192, %v1243
      %v1245 = vpop.f32.mrb[0].mxu0
      %v1246 = vpop.f32.mrb[0].mxu0
      %v1247 = vpop.f32.mrb[0].mxu0
      %1248 = vdwg.mxu0
      %v1249 = vunpack.c.l.bf16 %v499
      %v1250 = vadd.f32 %v1244, %v1249
      %v1251 = vsel %vm525, %v1250, 0.0
      %1252 = vadd.xlane.f32.xlu0 %v1251
      %v1253 = vpop.xlane.xlu0 %1252
      %v1254 = vrcp.pop 32.0
      %v1255 = vmul.f32 %v1253, %v1254
      %v1256 = vsub.f32 %v1250, %v1255
      %v1257 = vmul.f32 %v1256, %v1256
      %v1258 = vsel %vm525, %v1257, 0.0
      %1259 = vadd.xlane.f32.xlu0 %v1258
      %v1260 = vpop.xlane.xlu0 %1259
      %v1261 = vmul.f32 %v1260, %v1254
      %v1262 = vadd.f32 %v1261, 1e-12
      %v1263 = vrsqrt.pop %v1262
      %v1264 = vmul.f32 %v1256, %v1263
      %v1265 = vld [vmem:[%s11] sm:$0x1]
      %v1267 = vlaneseq
      %v1268 = vshrl.u32 %v1267, 7
      %v1269 = vsub.s32 0, %v1268
      %v1270 = vrot.slane %v1265, %v1269
      %v1272 = vmul.f32 %v1264, %v1270
      %v1273 = vld [vmem:[%s12] sm:$0x1]
      %v1275 = vlaneseq
      %v1276 = vshrl.u32 %v1275, 7
      %v1277 = vsub.s32 0, %v1276
      %v1278 = vrot.slane %v1273, %v1277
      %v1280 = vadd.f32 %v1272, %v1278
      %v1281 = vpack.c.bf16 %v1280, %v1280
      %vm1282 = vcmask 257024
      %1283 = vst.msk [vmem:[%s497] sm:$0xf] %vm1282, %v1281
      %p1284 = scmp.lt.s32.totalorder %s28, 1
      %s1285 = scalar_select %p1284, %s28, 1
      %p1286 = scmp.lt.s32.totalorder %s29, 0
      %s1287 = scalar_select %p1286, %s29, 0
      %s1288 = sadd.s32 %s1287, %s1285
      %s1289 = smul.addr %s1288, 4
      %s1290 = scalar_lea.vmem %s13, %s1289
      // Predicated region
      $region73: #{bert_softmax_for_ner_forward.7} parent=71 // pred_check
        %p1291 = pneg %p346
      $region74: #{bert_softmax_for_ner_forward.7} parent=71 // pred_check_branch
        %1293 = sbr.rel (%p1291) target = $region76
      $region75: #{bert_softmax_for_ner_forward.7} parent=71 // pred_region
        _
      $region76: #{bert_softmax_for_ner_forward.7} parent=71 // pred_fallthru
        _
    $region72: #{bert_softmax_for_ner_forward.7} parent=5 // pred_fallthru
      _
    %p1294 = scmp.le.s32.totalorder 2, %s19
    // Predicated region
    $region77: #{bert_softmax_for_ner_forward.7} parent=5 // pred_check
      %p1295 = pneg %p1294
    $region78: #{bert_softmax_for_ner_forward.7} parent=5 // pred_check_branch
      %1297 = sbr.rel (%p1295) target = $region80
    $region79: #{bert_softmax_for_ner_forward.7} parent=5 // pred_region
      %s1298 = ssub.s32 %s19, 2
      // Predicated region
      $region81: #{bert_softmax_for_ner_forward.7} parent=79 // pred_check
        %p1299 = pneg %p352
      $region82: #{bert_softmax_for_ner_forward.7} parent=79 // pred_check_branch
        %1301 = sbr.rel (%p1299) target = $region84
      $region83: #{bert_softmax_for_ner_forward.7} parent=79 // pred_region
        %p1302 = scmp.lt.s32.totalorder %s30, 1
        %s1303 = scalar_select %p1302, %s30, 1
        %p1304 = scmp.lt.s32.totalorder %s31, 0
        %s1305 = scalar_select %p1304, %s31, 0
        %s1306 = sadd.s32 %s1305, %s1303
        %s1307 = smul.addr %s1306, 4
        %s1308 = scalar_lea.vmem %s13, %s1307
      $region84: #{bert_softmax_for_ner_forward.7} parent=79 // pred_fallthru
        _
    $region80: #{bert_softmax_for_ner_forward.7} parent=5 // pred_fallthru
      _
  $region6: #{bert_softmax_for_ner_forward.7} parent=0 // loop_footer
    %s23 = sadd.s32 1, %s19
  $region7: #{bert_softmax_for_ner_forward.7} parent=0 // loop_footer_branch
    %18 = sbr.rel target = $region3
  $region8: #{bert_softmax_for_ner_forward.7} parent=0 // loop_exit
    _

// kernel: bert_softmax_for_ner_forward.11
$region0: #{bert_softmax_for_ner_forward.11}
  #allocation0 [shape = 'u32[]', space=smem, size = 0x4, offset = 0x4, fixed_abs, tag = 'smem constant byte address 0x4 - core index']
  #allocation1 [shape = 'u32[144,128]{1,0:T(1,128)}', space=vmem, size = 0x12000, scoped, tag = 'internal scratch']
  #allocation2 [shape = 'f32[2]{0:T(128)}', space=smem, size = 0x200, scoped, tag = 'scratch operand']
  %s0 = inlined_call_operand.vmem [shape: bf16[16,32], index: 0, kind: input, shape index: {}]
  %s1 = inlined_call_operand.vmem [shape: bf16[32,128], index: 1, kind: input, shape index: {}]
  %s2 = inlined_call_operand.vmem [shape: f32[1,128], index: 2, kind: input, shape index: {}]
  %s3 = inlined_call_operand.vmem [shape: s32[16,1], index: 3, kind: input, shape index: {}]
  %s4 = inlined_call_operand.vmem [shape: f32[16,128], index: 4, kind: output, shape index: {0}]
  %s5 = inlined_call_operand.hbm [shape: f32[1,1], index: 5, kind: output, shape index: {1}]
  %6 = xla_tuple %s4, %s5
  %s7 = sld [smem:[#allocation0]]
  $region42: #{bert_softmax_for_ner_forward.11} parent=0
    _
  %s9 = ssub.s32 1, %s7
  %s10 = scalar_select 0, %s9, %s7
  $region1: #{bert_softmax_for_ner_forward.11} parent=0
    #allocation3 [shape = 'u8[512]{0}', space=smem, size = 0x200, scoped, tag = 'output window, operand 1, single buffered']
    #allocation4 [shape = 's32[1]{0}', space=sflag, size = 0x4, scoped, tag = 'scoped memory for bert_softmax_for_ner_forward.11']
    %11 = vsyncpa [#allocation4], 0
    // Predicated region
    $region2: #{bert_softmax_for_ner_forward.11} parent=1 // pred_check
      _
    $region3: #{bert_softmax_for_ner_forward.11} parent=1 // pred_check_branch
      %13 = sbr.rel (0) target = $region5
    $region4: #{bert_softmax_for_ner_forward.11} parent=1 // pred_region
      _
    $region5: #{bert_softmax_for_ner_forward.11} parent=1 // pred_fallthru
      _
    // Predicated region
    $region6: #{bert_softmax_for_ner_forward.11} parent=1 // pred_check
      _
    $region7: #{bert_softmax_for_ner_forward.11} parent=1 // pred_check_branch
      %15 = sbr.rel (0) target = $region9
    $region8: #{bert_softmax_for_ner_forward.11} parent=1 // pred_region
      _
    $region9: #{bert_softmax_for_ner_forward.11} parent=1 // pred_fallthru
      _
    // Predicated region
    $region10: #{bert_softmax_for_ner_forward.11} parent=1 // pred_check
      _
    $region11: #{bert_softmax_for_ner_forward.11} parent=1 // pred_check_branch
      %17 = sbr.rel (0) target = $region13
    $region12: #{bert_softmax_for_ner_forward.11} parent=1 // pred_region
      _
    $region13: #{bert_softmax_for_ner_forward.11} parent=1 // pred_fallthru
      _
    // Predicated region
    $region14: #{bert_softmax_for_ner_forward.11} parent=1 // pred_check
      _
    $region15: #{bert_softmax_for_ner_forward.11} parent=1 // pred_check_branch
      %19 = sbr.rel (0) target = $region17
    $region16: #{bert_softmax_for_ner_forward.11} parent=1 // pred_region
      _
    $region17: #{bert_softmax_for_ner_forward.11} parent=1 // pred_fallthru
      _
    %p21 = scmp.eq.s32.totalorder 0, 0
    // Predicated region
    $region18: #{bert_softmax_for_ner_forward.11} parent=1 // pred_check
      %p22 = pneg %p21
    $region19: #{bert_softmax_for_ner_forward.11} parent=1 // pred_check_branch
      %24 = sbr.rel (%p22) target = $region21
    $region20: #{bert_softmax_for_ner_forward.11} parent=1 // pred_region
      %s25 = scalar_lea.smem [#allocation2], 0
      %26 = sst [smem:[%s25]] 0.0
      %s27 = scalar_lea.smem [#allocation2], 1
      %28 = sst [smem:[%s27]] 0.0
    $region21: #{bert_softmax_for_ner_forward.11} parent=1 // pred_fallthru
      _
    %v29 = vld [vmem:[%s0] sm:$0xf]
    %v30 = vld [vmem:[%s0 + $0x4] sm:$0xf]
    %v31 = vld [vmem:[%s1] sm:$0xf]
    %v32 = vld [vmem:[%s1 + $0x4] sm:$0xf]
    %v33 = vld [vmem:[%s1 + $0x8] sm:$0xf]
    %v34 = vld [vmem:[%s1 + $0xc] sm:$0xf]
    %v35 = vld [vmem:[%s2] sm:$0x1]
    %v37 = vlaneseq
    %v38 = vshrl.u32 %v37, 7
    %v39 = vsub.s32 0, %v38
    %v40 = vrot.slane %v35, %v39
    %v44 = vunpack.c.l.b16 %v29
    %v45 = vunpack.c.l.b16 %v30
    %v46 = vpack.c.b16 %v45, %v44
    %v51 = vunpack.c.l.b16 %v31
    %v52 = vunpack.c.l.b16 %v32
    %v53 = vunpack.c.l.b16 %v33
    %v54 = vunpack.c.l.b16 %v34
    %v55 = vpack.c.b16 %v52, %v51
    %v56 = vpack.c.b16 %v54, %v53
    %vm59 = vcmask 261120
    %v61 = vsel %vm59, %v46, 0
    %63 = vmatprep.subr.bf16.mxu0 0
    %64 = vmatpush1.bf16.msra.mxu0 %v55
    %65 = vmatprep.subr.bf16.mxu0 0
    %66 = vmatpush1.bf16.msra.mxu0 %v56
    %67 = vmatprep.subr.bf16.mxu0 0
    %68 = vmatpush1.bf16.msra.mxu0 0
    %69 = vmatprep.subr.bf16.mxu0 0
    %70 = vmatpush1.bf16.msra.mxu0 0
    %71 = vmatprep.subr.bf16.mxu0 0
    %72 = vmatpush1.bf16.msra.mxu0 0
    %73 = vmatprep.subr.bf16.mxu0 0
    %74 = vmatpush1.bf16.msra.mxu0 0
    %75 = vmatprep.subr.bf16.mxu0 0
    %76 = vmatpush1.bf16.msra.mxu0 0
    %77 = vmatprep.subr.bf16.mxu0 0
    %78 = vmatpush1.bf16.msra.mxu0 0
    %79 = vmatprep.subr.bf16.mxu0 0
    %80 = vmatpush1.bf16.msra.mxu0 0
    %81 = vmatprep.subr.bf16.mxu0 0
    %82 = vmatpush1.bf16.msra.mxu0 0
    %83 = vmatprep.subr.bf16.mxu0 0
    %84 = vmatpush1.bf16.msra.mxu0 0
    %85 = vmatprep.subr.bf16.mxu0 0
    %86 = vmatpush1.bf16.msra.mxu0 0
    %87 = vmatprep.subr.bf16.mxu0 0
    %88 = vmatpush1.bf16.msra.mxu0 0
    %89 = vmatprep.subr.bf16.mxu0 0
    %90 = vmatpush1.bf16.msra.mxu0 0
    %91 = vmatprep.subr.bf16.mxu0 0
    %92 = vmatpush1.bf16.msra.mxu0 0
    %93 = vmatprep.subr.bf16.mxu0 0
    %94 = vmatpush1.bf16.msra.mxu0 0
    %95 = vmatprep.mubr.bf16.mxu0 0
    %96 = vmatmul.mubr.bf16.gmra.mrb[0].mxu0 %v61
    %v97 = vpop.f32.mrb[0].mxu0
    %v98 = vadd.f32 %v40, %v97
    %v99 = vpop.f32.mrb[0].mxu0
    %v100 = vpop.f32.mrb[0].mxu0
    %v101 = vadd.f32 %v40, %v100
    %v102 = vpop.f32.mrb[0].mxu0
    %103 = vdwg.mxu0
    %104 = vst [vmem:[%s4] sm:$0xff] %v98
    %105 = vst [vmem:[%s4 + $0x8] sm:$0xff] %v101
    %v106 = vld [vmem:[%s3] sm:$0xff]
    %v107 = vld [vmem:[%s3 + $0x8] sm:$0xff]
    %108 = vmax.xlane.f32.xlu0 %v98
    %v109 = vpop.xlane.xlu0 %108
    %110 = vmax.xlane.f32.xlu0 %v101
    %v111 = vpop.xlane.xlu0 %110
    %v112 = vsub.f32 %v98, %v109
    %v113 = vsub.f32 %v101, %v111
    %v114 = vmul.f32 %v112, 1.442695
    %v115 = vpow.pop %v114
    %v116 = vmul.f32 %v113, 1.442695
    %v117 = vpow.pop %v116
    %118 = vadd.xlane.f32.xlu0 %v115
    %v119 = vpop.xlane.xlu0 %118
    %120 = vadd.xlane.f32.xlu0 %v117
    %v121 = vpop.xlane.xlu0 %120
    %v122 = vlog2.pop %v119
    %v123 = vmul.f32 %v122, 0.6931472
    %v124 = vlog2.pop %v121
    %v125 = vmul.f32 %v124, 0.6931472
    %v126 = vadd.f32 %v123, %v109
    %v127 = vadd.f32 %v125, %v111
    %v128 = vsub.f32 %v98, %v126
    %v129 = vsub.f32 %v101, %v127
    %v130 = vlaneseq
    %v131 = vand.u32 %v130, 127
    %132 = vset.pattern.permute.xlu0 0
    %133 = vperm.xlu0 %132, %v106
    %v134 = vpop.permute.xlu0 %133
    %135 = vset.pattern.permute.xlu0 0
    %136 = vperm.xlu0 %135, %v107
    %v137 = vpop.permute.xlu0 %136
    %vm138 = vcmp.eq.s32.totalorder %v131, %v134
    %vm139 = vcmp.eq.s32.totalorder %v131, %v137
    %v140 = vsel %vm138, 1, 0
    %v141 = vsel %vm139, 1, 0
    %v142 = vcvt.s32.f32 %v140
    %v143 = vcvt.s32.f32 %v141
    %v144 = vmul.f32 %v142, %v128
    %v145 = vmul.f32 %v143, %v129
    %146 = vadd.xlane.f32.xlu0 %v144
    %v147 = vpop.xlane.xlu0 %146
    %148 = vadd.xlane.f32.xlu0 %v145
    %v149 = vpop.xlane.xlu0 %148
    %v150 = vsub.f32 0.0, %v147
    %v151 = vsub.f32 0.0, %v149
    %vm152 = vcmp.ne.s32.totalorder %v106, 0
    %vm153 = vcmp.ne.s32.totalorder %v107, 0
    %v154 = vsel %vm152, 1, 0
    %v155 = vsel %vm153, 1, 0
    %v156 = vcvt.s32.f32 %v154
    %v157 = vcvt.s32.f32 %v155
    %s158 = sld [smem:[#allocation2]]
    %v159 = vmul.f32 %v150, %v156
    %v160 = vmul.f32 %v151, %v157
    %vm161 = vcmask 7168
    %v162 = vsel %vm161, %v159, 0.0
    %v163 = vsel %vm161, %v160, 0.0
    %v164 = vadd.f32 %v162, %v163
    %165 = vadd.xlane.f32.xlu0 %v164
    %v166 = vpop.xlane.xlu0 %165
    %v167 = vrot.slane %v166, 4
    %v168 = vadd.f32 %v166, %v167
    %v169 = vrot.slane %v168, 2
    %v170 = vadd.f32 %v168, %v169
    %v171 = vrot.slane %v170, 1
    %v172 = vadd.f32 %v170, %v171
    %s173 = vtos %v172
    %s174 = sadd.f32 %s158, %s173
    %s175 = scalar_lea.smem [#allocation2], 0
    %176 = sst [smem:[%s175]] %s174
    %s177 = sld [smem:[#allocation2 + $0x1]]
    %v178 = vsel %vm161, %v156, 0.0
    %v179 = vsel %vm161, %v157, 0.0
    %v180 = vadd.f32 %v178, %v179
    %181 = vadd.xlane.f32.xlu0 %v180
    %v182 = vpop.xlane.xlu0 %181
    %v183 = vrot.slane %v182, 4
    %v184 = vadd.f32 %v182, %v183
    %v185 = vrot.slane %v184, 2
    %v186 = vadd.f32 %v184, %v185
    %v187 = vrot.slane %v186, 1
    %v188 = vadd.f32 %v186, %v187
    %s189 = vtos %v188
    %s190 = sadd.f32 %s177, %s189
    %s191 = scalar_lea.smem [#allocation2], 1
    %192 = sst [smem:[%s191]] %s190
    // Predicated region
    $region22: #{bert_softmax_for_ner_forward.11} parent=1 // pred_check
      %p193 = pneg %p21
    $region23: #{bert_softmax_for_ner_forward.11} parent=1 // pred_check_branch
      %195 = sbr.rel (%p193) target = $region25
    $region24: #{bert_softmax_for_ner_forward.11} parent=1 // pred_region
      %s196 = sld [smem:[#allocation2]]
      %s197 = sld [smem:[#allocation2 + $0x1]]
      %s198 = smax.f32 %s197, 1.0
      %v199 = vstv %s198
      %v200 = vrcp.pop %v199
      %s201 = vtos %v200
      %s202 = smul.f32 %s196, %s201
      %s203 = scalar_lea.smem [#allocation3], 0
      %204 = sst [smem:[%s203]] %s202
    $region25: #{bert_softmax_for_ner_forward.11} parent=1 // pred_fallthru
      _
    // Predicated region
    $region26: #{bert_softmax_for_ner_forward.11} parent=1 // pred_check
      _
    $region27: #{bert_softmax_for_ner_forward.11} parent=1 // pred_check_branch
      %206 = sbr.rel (0) target = $region29
    $region28: #{bert_softmax_for_ner_forward.11} parent=1 // pred_region
      _
    $region29: #{bert_softmax_for_ner_forward.11} parent=1 // pred_fallthru
      _
    // Predicated region
    $region30: #{bert_softmax_for_ner_forward.11} parent=1 // pred_check
      _
    $region31: #{bert_softmax_for_ner_forward.11} parent=1 // pred_check_branch
      %208 = sbr.rel (0) target = $region33
    $region32: #{bert_softmax_for_ner_forward.11} parent=1 // pred_region
      %s210 = ssub.s32 16, 16
      %211 = vsyncadd [#allocation4], %s210
      %214 = dma.smem_to_hbm [#allocation3], 16, %s5, [#allocation4]
    $region33: #{bert_softmax_for_ner_forward.11} parent=1 // pred_fallthru
      _
    // Predicated region
    $region34: #{bert_softmax_for_ner_forward.11} parent=1 // pred_check
      _
    $region35: #{bert_softmax_for_ner_forward.11} parent=1 // pred_check_branch
      %216 = sbr.rel (0) target = $region37
    $region36: #{bert_softmax_for_ner_forward.11} parent=1 // pred_region
      _
    $region37: #{bert_softmax_for_ner_forward.11} parent=1 // pred_fallthru
      _
    // Predicated region
    $region38: #{bert_softmax_for_ner_forward.11} parent=1 // pred_check
      _
    $region39: #{bert_softmax_for_ner_forward.11} parent=1 // pred_check_branch
      %218 = sbr.rel (0) target = $region41
    $region40: #{bert_softmax_for_ner_forward.11} parent=1 // pred_region
      %219 = dma.done [#allocation4], 16
    $region41: #{bert_softmax_for_ner_forward.11} parent=1 // pred_fallthru
      _
    %220 = sfence
    %221 = vsyncpa [#allocation4], 1

</llo_original>
